<compile_context>
chip_gen: v5e
topology: v5e:2x2
jax: 0.10.0
libtpu: 0.0.40
codegen_flags: <defaults>
</compile_context>

<pallas_src>
import jax
import jax.numpy as jnp
from jax import lax
from jax.experimental import pallas as pl
from jax.experimental.pallas import tpu as pltpu  # noqa: F401  (TPU backend)

# ---------------- model dims (small, consistent with the module) -------------
B, CIN, H, W = 2, 4, 16, 16
COUT = 8
HIDDEN = 32
CLASSES = 10
KH = KW = 3
P = H * W                      # 256 spatial positions per sample
K = KH * KW * CIN              # 36 im2col contraction size
KPAD = 128                     # lane-dense conv contraction
HPAD = 128                     # lane-dense hidden width (>= HIDDEN)
NPAD = 128                     # lane-dense output width (>= CLASSES)


# ---------------- fused Pallas kernel -----------------------------------------
def fused_kernel(pt_ref, wcT_ref, bc_ref, w1_ref, b1_ref, w2_ref, b2_ref, o_ref):
    """Conv(3x3)+ReLU -> flatten -> FC1+ReLU -> FC2, all in VMEM.

    pt_ref  : [KPAD, B*P]       im2col patches, transposed, K zero-padded to 128
    wcT_ref : [COUT, KPAD]      conv weight, transposed, K zero-padded
    bc_ref  : [COUT, 1]         conv bias (lane-broadcast)
    w1_ref  : [COUT, P, HPAD]   fc1 weight, channel-major rows, hidden padded
    b1_ref  : [1, HPAD]         fc1 bias, padded with zeros
    w2_ref  : [HPAD, NPAD]      fc2 weight, zero-padded rows and lanes
    b2_ref  : [1, NPAD]         fc2 bias, padded with zeros
    o_ref   : [B, NPAD]         lane-dense output; cols >= CLASSES are zero
    """
    wcT = wcT_ref[...]
    bc = bc_ref[...]
    b1 = b1_ref[...]
    w2 = w2_ref[...]
    b2 = b2_ref[...]

    # Conv for ALL samples in one MXU pass: [COUT, KPAD] @ [KPAD, B*P] -> [COUT, B*P]
    conv = jnp.maximum(
        jnp.dot(wcT, pt_ref[...], preferred_element_type=jnp.float32) + bc, 0.0)

    # FC1: h1[b, j] = relu(b1[j] + sum_c sum_p conv[c, b*P+p] * w1[c, p, j]).
    # Per-channel matmuls over the full spatial axis; each w1 slab is loaded once
    # and reused for both samples (static unroll, B=2, COUT=8).
    accs = [b1 for _ in range(B)]                       # each [1, HPAD]
    for c in range(COUT):                               # static unroll
        w1c = w1_ref[c]                                 # [P, HPAD]
        for b in range(B):
            accs[b] = accs[b] + jnp.dot(
                conv[c:c + 1, b * P:(b + 1) * P], w1c,
                preferred_element_type=jnp.float32)
    h1 = jnp.maximum(jnp.concatenate(accs, axis=0), 0.0)   # [B, HPAD]

    # FC2 for all samples at once, single lane-dense [B, NPAD] store.
    o_ref[...] = jnp.dot(h1, w2, preferred_element_type=jnp.float32) + b2


def _full_spec(shape):
    return pl.BlockSpec(shape, lambda: tuple(0 for _ in shape))


# ---------------- wrapper ------------------------------------------------------
def _forward_impl(x_nchw, params):
    """x_nchw: [B, CIN, H, W] float32 (PyTorch convention)."""
    w_conv, b_conv, w_fc1, b_fc1, w_fc2, b_fc2 = params

    # ---- layout glue (XLA): NCHW -> NHWC, im2col (transposed), zero-padding ----
    x = jnp.transpose(x_nchw, (0, 2, 3, 1)).astype(jnp.float32)          # NHWC
    x_pad = jnp.pad(x, ((0, 0), (1, 1), (1, 1), (0, 0)))
    taps = [x_pad[:, kh:kh + H, kw:kw + W, :]
            for kh in range(KH) for kw in range(KW)]
    patches = jnp.stack(taps, axis=3).reshape(B, P, K)                   # [B,P,K]
    patchesT = jnp.transpose(patches, (2, 0, 1)).reshape(K, B * P)       # [K,B*P]
    patchesT = jnp.pad(patchesT, ((0, KPAD - K), (0, 0)))                # [KPAD,B*P]

    wcT = jnp.pad(w_conv.reshape(K, COUT).T, ((0, 0), (0, KPAD - K)))    # [COUT,KPAD]
    w1k = jnp.pad(w_fc1.reshape(COUT, P, HIDDEN),
                  ((0, 0), (0, 0), (0, HPAD - HIDDEN)))                  # [COUT,P,HPAD]
    b1p = jnp.pad(b_fc1, (0, HPAD - HIDDEN)).reshape(1, HPAD)
    w2p = jnp.pad(w_fc2, ((0, HPAD - HIDDEN), (0, NPAD - CLASSES)))      # [HPAD,NPAD]
    b2p = jnp.pad(b_fc2, (0, NPAD - CLASSES)).reshape(1, NPAD)

    out_pad = pl.pallas_call(
        fused_kernel,
        out_shape=jax.ShapeDtypeStruct((B, NPAD), jnp.float32),
        in_specs=[
            _full_spec((KPAD, B * P)),
            _full_spec((COUT, KPAD)),
            _full_spec((COUT, 1)),
            _full_spec((COUT, P, HPAD)),
            _full_spec((1, HPAD)),
            _full_spec((HPAD, NPAD)),
            _full_spec((1, NPAD)),
        ],
        out_specs=_full_spec((B, NPAD)),
    )(patchesT, wcT, b_conv.reshape(COUT, 1), w1k, b1p, w2p, b2p)

    return out_pad[:, :CLASSES]


forward = jax.jit(_forward_impl)


# ---------------- pure-JAX reference (for numerics check) --------------------
def forward_ref(x_nchw, params):
    w_conv, b_conv, w_fc1, b_fc1, w_fc2, b_fc2 = params
    x = jnp.transpose(x_nchw, (0, 2, 3, 1)).astype(jnp.float32)
    conv = lax.conv_general_dilated(
        x, w_conv, window_strides=(1, 1), padding="SAME",
        dimension_numbers=("NHWC", "HWIO", "NHWC"),
    ) + b_conv
    relu = jnp.maximum(conv, 0.0)
    # PyTorch-style flatten: conv output NCHW, then view(B, -1)  (channel-major)
    feat = jnp.transpose(relu, (0, 3, 1, 2)).reshape(B, COUT * H * W)
    h = jnp.maximum(feat @ w_fc1 + b_fc1, 0.0)
    return h @ w_fc2 + b_fc2


# ---------------- deterministic parameter init --------------------------------
def init_params(key):
    ks = jax.random.split(key, 6)
    w_conv = 0.1 * jax.random.normal(ks[0], (KH, KW, CIN, COUT), jnp.float32)  # HWIO
    b_conv = 0.1 * jax.random.normal(ks[1], (COUT,), jnp.float32)
    w_fc1 = 0.05 * jax.random.normal(ks[2], (COUT * H * W, HIDDEN), jnp.float32)
    b_fc1 = 0.05 * jax.random.normal(ks[3], (HIDDEN,), jnp.float32)
    w_fc2 = 0.05 * jax.random.normal(ks[4], (HIDDEN, CLASSES), jnp.float32)
    b_fc2 = 0.05 * jax.random.normal(ks[5], (CLASSES,), jnp.float32)
    return (w_conv, b_conv, w_fc1, b_fc1, w_fc2, b_fc2)


if __name__ == "__main__":
    key = jax.random.PRNGKey(0)
    k_x, k_p = jax.random.split(key)
    x = jax.random.normal(k_x, (B, CIN, H, W), jnp.float32)  # NCHW like PyTorch
    params = init_params(k_p)

    out = jax.block_until_ready(forward(x, params))
    ref = jax.block_until_ready(forward_ref(x, params))

    assert out.shape == (B, CLASSES), out.shape
    assert jnp.allclose(out, ref, atol=1e-4, rtol=1e-4), (
        float(jnp.max(jnp.abs(out - ref)))
    )
    print("KERNEL_OK")
</pallas_src>

<mosaic_0001>
module attributes {stable_mosaic.version = 11 : i64} {
  func.func @fused_kernel(%arg0: memref<128x512xf32, #tpu.memory_space<vmem>>, %arg1: memref<8x128xf32, #tpu.memory_space<vmem>>, %arg2: memref<8x1xf32, #tpu.memory_space<vmem>>, %arg3: memref<8x256x128xf32, #tpu.memory_space<vmem>>, %arg4: memref<1x128xf32, #tpu.memory_space<vmem>>, %arg5: memref<128x128xf32, #tpu.memory_space<vmem>>, %arg6: memref<1x128xf32, #tpu.memory_space<vmem>>, %arg7: memref<2x128xf32, #tpu.memory_space<vmem>>) attributes {dimension_semantics = [], scalar_prefetch = 0 : i64, scratch_operands = 0 : i64, tpu.core_type = #tpu.core_type<tc>} {
    %c0 = arith.constant 0 : index
    %c0_0 = arith.constant 0 : index
    %0 = vector.load %arg1[%c0, %c0_0] : memref<8x128xf32, #tpu.memory_space<vmem>>, vector<8x128xf32>
    %c0_1 = arith.constant 0 : index
    %c0_2 = arith.constant 0 : index
    %1 = vector.load %arg2[%c0_1, %c0_2] : memref<8x1xf32, #tpu.memory_space<vmem>>, vector<8x1xf32>
    %c0_3 = arith.constant 0 : index
    %c0_4 = arith.constant 0 : index
    %2 = vector.load %arg4[%c0_3, %c0_4] : memref<1x128xf32, #tpu.memory_space<vmem>>, vector<1x128xf32>
    %c0_5 = arith.constant 0 : index
    %c0_6 = arith.constant 0 : index
    %3 = vector.load %arg5[%c0_5, %c0_6] : memref<128x128xf32, #tpu.memory_space<vmem>>, vector<128x128xf32>
    %c0_7 = arith.constant 0 : index
    %c0_8 = arith.constant 0 : index
    %4 = vector.load %arg6[%c0_7, %c0_8] : memref<1x128xf32, #tpu.memory_space<vmem>>, vector<1x128xf32>
    %c0_9 = arith.constant 0 : index
    %c0_10 = arith.constant 0 : index
    %5 = vector.load %arg0[%c0_9, %c0_10] : memref<128x512xf32, #tpu.memory_space<vmem>>, vector<128x512xf32>
    %cst = arith.constant dense<0.000000e+00> : vector<8x512xf32>
    %6 = tpu.matmul %0, %5, %cst {dimension_numbers = #tpu.dot_dimension_numbers<[1], [0], [0], [1], [0, 0, 1, 1], [], []>} : vector<8x128xf32>, vector<128x512xf32>, vector<8x512xf32> -> vector<8x512xf32>
    %7 = vector.broadcast %1 : vector<8x1xf32> to vector<8x512xf32>
    %8 = arith.addf %6, %7 : vector<8x512xf32>
    %cst_11 = arith.constant 0.000000e+00 : f32
    %9 = vector.broadcast %cst_11 : f32 to vector<8x512xf32>
    %10 = arith.maximumf %8, %9 : vector<8x512xf32>
    %c0_12 = arith.constant 0 : index
    %c0_13 = arith.constant 0 : index
    %c0_14 = arith.constant 0 : index
    %11 = vector.load %arg3[%c0_12, %c0_13, %c0_14] : memref<8x256x128xf32, #tpu.memory_space<vmem>>, vector<1x256x128xf32>
    %12 = vector.shape_cast %11 : vector<1x256x128xf32> to vector<256x128xf32>
    %13 = vector.extract_strided_slice %10 {offsets = [0, 0], sizes = [1, 256], strides = [1, 1]} : vector<8x512xf32> to vector<1x256xf32>
    %cst_15 = arith.constant dense<0.000000e+00> : vector<1x128xf32>
    %14 = tpu.matmul %13, %12, %cst_15 {dimension_numbers = #tpu.dot_dimension_numbers<[1], [0], [0], [1], [0, 0, 1, 1], [], []>} : vector<1x256xf32>, vector<256x128xf32>, vector<1x128xf32> -> vector<1x128xf32>
    %15 = arith.addf %2, %14 : vector<1x128xf32>
    %16 = vector.extract_strided_slice %10 {offsets = [0, 256], sizes = [1, 256], strides = [1, 1]} : vector<8x512xf32> to vector<1x256xf32>
    %cst_16 = arith.constant dense<0.000000e+00> : vector<1x128xf32>
    %17 = tpu.matmul %16, %12, %cst_16 {dimension_numbers = #tpu.dot_dimension_numbers<[1], [0], [0], [1], [0, 0, 1, 1], [], []>} : vector<1x256xf32>, vector<256x128xf32>, vector<1x128xf32> -> vector<1x128xf32>
    %18 = arith.addf %2, %17 : vector<1x128xf32>
    %c1 = arith.constant 1 : index
    %c0_17 = arith.constant 0 : index
    %c0_18 = arith.constant 0 : index
    %19 = vector.load %arg3[%c1, %c0_17, %c0_18] : memref<8x256x128xf32, #tpu.memory_space<vmem>>, vector<1x256x128xf32>
    %20 = vector.shape_cast %19 : vector<1x256x128xf32> to vector<256x128xf32>
    %21 = vector.extract_strided_slice %10 {offsets = [1, 0], sizes = [1, 256], strides = [1, 1]} : vector<8x512xf32> to vector<1x256xf32>
    %cst_19 = arith.constant dense<0.000000e+00> : vector<1x128xf32>
    %22 = tpu.matmul %21, %20, %cst_19 {dimension_numbers = #tpu.dot_dimension_numbers<[1], [0], [0], [1], [0, 0, 1, 1], [], []>} : vector<1x256xf32>, vector<256x128xf32>, vector<1x128xf32> -> vector<1x128xf32>
    %23 = arith.addf %15, %22 : vector<1x128xf32>
    %24 = vector.extract_strided_slice %10 {offsets = [1, 256], sizes = [1, 256], strides = [1, 1]} : vector<8x512xf32> to vector<1x256xf32>
    %cst_20 = arith.constant dense<0.000000e+00> : vector<1x128xf32>
    %25 = tpu.matmul %24, %20, %cst_20 {dimension_numbers = #tpu.dot_dimension_numbers<[1], [0], [0], [1], [0, 0, 1, 1], [], []>} : vector<1x256xf32>, vector<256x128xf32>, vector<1x128xf32> -> vector<1x128xf32>
    %26 = arith.addf %18, %25 : vector<1x128xf32>
    %c2 = arith.constant 2 : index
    %c0_21 = arith.constant 0 : index
    %c0_22 = arith.constant 0 : index
    %27 = vector.load %arg3[%c2, %c0_21, %c0_22] : memref<8x256x128xf32, #tpu.memory_space<vmem>>, vector<1x256x128xf32>
    %28 = vector.shape_cast %27 : vector<1x256x128xf32> to vector<256x128xf32>
    %29 = vector.extract_strided_slice %10 {offsets = [2, 0], sizes = [1, 256], strides = [1, 1]} : vector<8x512xf32> to vector<1x256xf32>
    %cst_23 = arith.constant dense<0.000000e+00> : vector<1x128xf32>
    %30 = tpu.matmul %29, %28, %cst_23 {dimension_numbers = #tpu.dot_dimension_numbers<[1], [0], [0], [1], [0, 0, 1, 1], [], []>} : vector<1x256xf32>, vector<256x128xf32>, vector<1x128xf32> -> vector<1x128xf32>
    %31 = arith.addf %23, %30 : vector<1x128xf32>
    %32 = vector.extract_strided_slice %10 {offsets = [2, 256], sizes = [1, 256], strides = [1, 1]} : vector<8x512xf32> to vector<1x256xf32>
    %cst_24 = arith.constant dense<0.000000e+00> : vector<1x128xf32>
    %33 = tpu.matmul %32, %28, %cst_24 {dimension_numbers = #tpu.dot_dimension_numbers<[1], [0], [0], [1], [0, 0, 1, 1], [], []>} : vector<1x256xf32>, vector<256x128xf32>, vector<1x128xf32> -> vector<1x128xf32>
    %34 = arith.addf %26, %33 : vector<1x128xf32>
    %c3 = arith.constant 3 : index
    %c0_25 = arith.constant 0 : index
    %c0_26 = arith.constant 0 : index
    %35 = vector.load %arg3[%c3, %c0_25, %c0_26] : memref<8x256x128xf32, #tpu.memory_space<vmem>>, vector<1x256x128xf32>
    %36 = vector.shape_cast %35 : vector<1x256x128xf32> to vector<256x128xf32>
    %37 = vector.extract_strided_slice %10 {offsets = [3, 0], sizes = [1, 256], strides = [1, 1]} : vector<8x512xf32> to vector<1x256xf32>
    %cst_27 = arith.constant dense<0.000000e+00> : vector<1x128xf32>
    %38 = tpu.matmul %37, %36, %cst_27 {dimension_numbers = #tpu.dot_dimension_numbers<[1], [0], [0], [1], [0, 0, 1, 1], [], []>} : vector<1x256xf32>, vector<256x128xf32>, vector<1x128xf32> -> vector<1x128xf32>
    %39 = arith.addf %31, %38 : vector<1x128xf32>
    %40 = vector.extract_strided_slice %10 {offsets = [3, 256], sizes = [1, 256], strides = [1, 1]} : vector<8x512xf32> to vector<1x256xf32>
    %cst_28 = arith.constant dense<0.000000e+00> : vector<1x128xf32>
    %41 = tpu.matmul %40, %36, %cst_28 {dimension_numbers = #tpu.dot_dimension_numbers<[1], [0], [0], [1], [0, 0, 1, 1], [], []>} : vector<1x256xf32>, vector<256x128xf32>, vector<1x128xf32> -> vector<1x128xf32>
    %42 = arith.addf %34, %41 : vector<1x128xf32>
    %c4 = arith.constant 4 : index
    %c0_29 = arith.constant 0 : index
    %c0_30 = arith.constant 0 : index
    %43 = vector.load %arg3[%c4, %c0_29, %c0_30] : memref<8x256x128xf32, #tpu.memory_space<vmem>>, vector<1x256x128xf32>
    %44 = vector.shape_cast %43 : vector<1x256x128xf32> to vector<256x128xf32>
    %45 = vector.extract_strided_slice %10 {offsets = [4, 0], sizes = [1, 256], strides = [1, 1]} : vector<8x512xf32> to vector<1x256xf32>
    %cst_31 = arith.constant dense<0.000000e+00> : vector<1x128xf32>
    %46 = tpu.matmul %45, %44, %cst_31 {dimension_numbers = #tpu.dot_dimension_numbers<[1], [0], [0], [1], [0, 0, 1, 1], [], []>} : vector<1x256xf32>, vector<256x128xf32>, vector<1x128xf32> -> vector<1x128xf32>
    %47 = arith.addf %39, %46 : vector<1x128xf32>
    %48 = vector.extract_strided_slice %10 {offsets = [4, 256], sizes = [1, 256], strides = [1, 1]} : vector<8x512xf32> to vector<1x256xf32>
    %cst_32 = arith.constant dense<0.000000e+00> : vector<1x128xf32>
    %49 = tpu.matmul %48, %44, %cst_32 {dimension_numbers = #tpu.dot_dimension_numbers<[1], [0], [0], [1], [0, 0, 1, 1], [], []>} : vector<1x256xf32>, vector<256x128xf32>, vector<1x128xf32> -> vector<1x128xf32>
    %50 = arith.addf %42, %49 : vector<1x128xf32>
    %c5 = arith.constant 5 : index
    %c0_33 = arith.constant 0 : index
    %c0_34 = arith.constant 0 : index
    %51 = vector.load %arg3[%c5, %c0_33, %c0_34] : memref<8x256x128xf32, #tpu.memory_space<vmem>>, vector<1x256x128xf32>
    %52 = vector.shape_cast %51 : vector<1x256x128xf32> to vector<256x128xf32>
    %53 = vector.extract_strided_slice %10 {offsets = [5, 0], sizes = [1, 256], strides = [1, 1]} : vector<8x512xf32> to vector<1x256xf32>
    %cst_35 = arith.constant dense<0.000000e+00> : vector<1x128xf32>
    %54 = tpu.matmul %53, %52, %cst_35 {dimension_numbers = #tpu.dot_dimension_numbers<[1], [0], [0], [1], [0, 0, 1, 1], [], []>} : vector<1x256xf32>, vector<256x128xf32>, vector<1x128xf32> -> vector<1x128xf32>
    %55 = arith.addf %47, %54 : vector<1x128xf32>
    %56 = vector.extract_strided_slice %10 {offsets = [5, 256], sizes = [1, 256], strides = [1, 1]} : vector<8x512xf32> to vector<1x256xf32>
    %cst_36 = arith.constant dense<0.000000e+00> : vector<1x128xf32>
    %57 = tpu.matmul %56, %52, %cst_36 {dimension_numbers = #tpu.dot_dimension_numbers<[1], [0], [0], [1], [0, 0, 1, 1], [], []>} : vector<1x256xf32>, vector<256x128xf32>, vector<1x128xf32> -> vector<1x128xf32>
    %58 = arith.addf %50, %57 : vector<1x128xf32>
    %c6 = arith.constant 6 : index
    %c0_37 = arith.constant 0 : index
    %c0_38 = arith.constant 0 : index
    %59 = vector.load %arg3[%c6, %c0_37, %c0_38] : memref<8x256x128xf32, #tpu.memory_space<vmem>>, vector<1x256x128xf32>
    %60 = vector.shape_cast %59 : vector<1x256x128xf32> to vector<256x128xf32>
    %61 = vector.extract_strided_slice %10 {offsets = [6, 0], sizes = [1, 256], strides = [1, 1]} : vector<8x512xf32> to vector<1x256xf32>
    %cst_39 = arith.constant dense<0.000000e+00> : vector<1x128xf32>
    %62 = tpu.matmul %61, %60, %cst_39 {dimension_numbers = #tpu.dot_dimension_numbers<[1], [0], [0], [1], [0, 0, 1, 1], [], []>} : vector<1x256xf32>, vector<256x128xf32>, vector<1x128xf32> -> vector<1x128xf32>
    %63 = arith.addf %55, %62 : vector<1x128xf32>
    %64 = vector.extract_strided_slice %10 {offsets = [6, 256], sizes = [1, 256], strides = [1, 1]} : vector<8x512xf32> to vector<1x256xf32>
    %cst_40 = arith.constant dense<0.000000e+00> : vector<1x128xf32>
    %65 = tpu.matmul %64, %60, %cst_40 {dimension_numbers = #tpu.dot_dimension_numbers<[1], [0], [0], [1], [0, 0, 1, 1], [], []>} : vector<1x256xf32>, vector<256x128xf32>, vector<1x128xf32> -> vector<1x128xf32>
    %66 = arith.addf %58, %65 : vector<1x128xf32>
    %c7 = arith.constant 7 : index
    %c0_41 = arith.constant 0 : index
    %c0_42 = arith.constant 0 : index
    %67 = vector.load %arg3[%c7, %c0_41, %c0_42] : memref<8x256x128xf32, #tpu.memory_space<vmem>>, vector<1x256x128xf32>
    %68 = vector.shape_cast %67 : vector<1x256x128xf32> to vector<256x128xf32>
    %69 = vector.extract_strided_slice %10 {offsets = [7, 0], sizes = [1, 256], strides = [1, 1]} : vector<8x512xf32> to vector<1x256xf32>
    %cst_43 = arith.constant dense<0.000000e+00> : vector<1x128xf32>
    %70 = tpu.matmul %69, %68, %cst_43 {dimension_numbers = #tpu.dot_dimension_numbers<[1], [0], [0], [1], [0, 0, 1, 1], [], []>} : vector<1x256xf32>, vector<256x128xf32>, vector<1x128xf32> -> vector<1x128xf32>
    %71 = arith.addf %63, %70 : vector<1x128xf32>
    %72 = vector.extract_strided_slice %10 {offsets = [7, 256], sizes = [1, 256], strides = [1, 1]} : vector<8x512xf32> to vector<1x256xf32>
    %cst_44 = arith.constant dense<0.000000e+00> : vector<1x128xf32>
    %73 = tpu.matmul %72, %68, %cst_44 {dimension_numbers = #tpu.dot_dimension_numbers<[1], [0], [0], [1], [0, 0, 1, 1], [], []>} : vector<1x256xf32>, vector<256x128xf32>, vector<1x128xf32> -> vector<1x128xf32>
    %74 = arith.addf %66, %73 : vector<1x128xf32>
    %75 = tpu.concatenate %71, %74 in 0 : vector<1x128xf32>, vector<1x128xf32> -> vector<2x128xf32>
    %cst_45 = arith.constant 0.000000e+00 : f32
    %76 = vector.broadcast %cst_45 : f32 to vector<2x128xf32>
    %77 = arith.maximumf %75, %76 : vector<2x128xf32>
    %cst_46 = arith.constant dense<0.000000e+00> : vector<2x128xf32>
    %78 = tpu.matmul %77, %3, %cst_46 {dimension_numbers = #tpu.dot_dimension_numbers<[1], [0], [0], [1], [0, 0, 1, 1], [], []>} : vector<2x128xf32>, vector<128x128xf32>, vector<2x128xf32> -> vector<2x128xf32>
    %79 = vector.broadcast %4 : vector<1x128xf32> to vector<2x128xf32>
    %80 = arith.addf %78, %79 : vector<2x128xf32>
    %c0_47 = arith.constant 0 : index
    %c0_48 = arith.constant 0 : index
    %81 = vector.load %arg7[%c0_47, %c0_48] : memref<2x128xf32, #tpu.memory_space<vmem>>, vector<2x128xf32>
    tpu.vector_store %arg7[%c0_47, %c0_48], %80 {strides = array<i32>} : memref<2x128xf32, #tpu.memory_space<vmem>>, vector<2x128xf32>,
    return
  }
}

</mosaic_0001>

<llo_original>
// kernel: _forward_impl.1
$region0: #{_forward_impl.1}
  #allocation0 [shape = 'u32[]', space=smem, size = 0x4, offset = 0x4, fixed_abs, tag = 'smem constant byte address 0x4 - core index']
  #allocation1 [shape = 'u32[72,128]{1,0:T(1,128)}', space=vmem, size = 0x9000, scoped, tag = 'internal scratch']
  %s0 = inlined_call_operand.vmem [shape: f32[128,512], index: 0, kind: input, shape index: {}]
  %s1 = inlined_call_operand.vmem [shape: f32[8,128], index: 1, kind: input, shape index: {}]
  %s2 = inlined_call_operand.vmem [shape: f32[8,1], index: 2, kind: input, shape index: {}]
  %s3 = inlined_call_operand.vmem [shape: f32[8,256,128], index: 3, kind: input, shape index: {}]
  %s4 = inlined_call_operand.vmem [shape: f32[1,128], index: 4, kind: input, shape index: {}]
  %s5 = inlined_call_operand.vmem [shape: f32[128,128], index: 5, kind: input, shape index: {}]
  %s6 = inlined_call_operand.vmem [shape: f32[1,128], index: 6, kind: input, shape index: {}]
  %s7 = inlined_call_operand.hbm [shape: f32[2,128], index: 7, kind: output, shape index: {}]
  %s8 = sld [smem:[#allocation0]]
  $region38: #{_forward_impl.1} parent=0
    _
  %s10 = ssub.s32 1, %s8
  %s11 = scalar_select 0, %s10, %s8
  $region1: #{_forward_impl.1} parent=0
    #allocation2 [shape = 'u8[1024]{0}', space=vmem, size = 0x400, scoped, tag = 'output window, operand 0, single buffered']
    #allocation3 [shape = 's32[1]{0}', space=sflag, size = 0x4, scoped, tag = 'scoped memory for _forward_impl.1']
    %12 = vsyncpa [#allocation3], 0
    // Predicated region
    $region2: #{_forward_impl.1} parent=1 // pred_check
      _
    $region3: #{_forward_impl.1} parent=1 // pred_check_branch
      %14 = sbr.rel (0) target = $region5
    $region4: #{_forward_impl.1} parent=1 // pred_region
      _
    $region5: #{_forward_impl.1} parent=1 // pred_fallthru
      _
    // Predicated region
    $region6: #{_forward_impl.1} parent=1 // pred_check
      _
    $region7: #{_forward_impl.1} parent=1 // pred_check_branch
      %16 = sbr.rel (0) target = $region9
    $region8: #{_forward_impl.1} parent=1 // pred_region
      _
    $region9: #{_forward_impl.1} parent=1 // pred_fallthru
      _
    // Predicated region
    $region10: #{_forward_impl.1} parent=1 // pred_check
      _
    $region11: #{_forward_impl.1} parent=1 // pred_check_branch
      %18 = sbr.rel (0) target = $region13
    $region12: #{_forward_impl.1} parent=1 // pred_region
      _
    $region13: #{_forward_impl.1} parent=1 // pred_fallthru
      _
    // Predicated region
    $region14: #{_forward_impl.1} parent=1 // pred_check
      _
    $region15: #{_forward_impl.1} parent=1 // pred_check_branch
      %20 = sbr.rel (0) target = $region17
    $region16: #{_forward_impl.1} parent=1 // pred_region
      _
    $region17: #{_forward_impl.1} parent=1 // pred_fallthru
      _
    // Predicated region
    $region18: #{_forward_impl.1} parent=1 // pred_check
      _
    $region19: #{_forward_impl.1} parent=1 // pred_check_branch
      %22 = sbr.rel (0) target = $region21
    $region20: #{_forward_impl.1} parent=1 // pred_region
      _
    $region21: #{_forward_impl.1} parent=1 // pred_fallthru
      _
    // Predicated region
    $region22: #{_forward_impl.1} parent=1 // pred_check
      _
    $region23: #{_forward_impl.1} parent=1 // pred_check_branch
      %24 = sbr.rel (0) target = $region25
    $region24: #{_forward_impl.1} parent=1 // pred_region
      _
    $region25: #{_forward_impl.1} parent=1 // pred_fallthru
      _
    // Predicated region
    $region26: #{_forward_impl.1} parent=1 // pred_check
      _
    $region27: #{_forward_impl.1} parent=1 // pred_check_branch
      %26 = sbr.rel (0) target = $region29
    $region28: #{_forward_impl.1} parent=1 // pred_region
      _
    $region29: #{_forward_impl.1} parent=1 // pred_fallthru
      _
    %v27 = vld [vmem:[%s1] sm:$0xff]
    %v28 = vld [vmem:[%s2] sm:$0xff]
    %v29 = vld [vmem:[%s4] sm:$0x1]
    %v30 = vld [vmem:[%s5] sm:$0xff]
    %v31 = vld [vmem:[%s5 + $0x8] sm:$0xff]
    %v32 = vld [vmem:[%s5 + $0x10] sm:$0xff]
    %v33 = vld [vmem:[%s5 + $0x18] sm:$0xff]
    %v34 = vld [vmem:[%s5 + $0x20] sm:$0xff]
    %v35 = vld [vmem:[%s5 + $0x28] sm:$0xff]
    %v36 = vld [vmem:[%s5 + $0x30] sm:$0xff]
    %v37 = vld [vmem:[%s5 + $0x38] sm:$0xff]
    %v38 = vld [vmem:[%s5 + $0x40] sm:$0xff]
    %v39 = vld [vmem:[%s5 + $0x48] sm:$0xff]
    %v40 = vld [vmem:[%s5 + $0x50] sm:$0xff]
    %v41 = vld [vmem:[%s5 + $0x58] sm:$0xff]
    %v42 = vld [vmem:[%s5 + $0x60] sm:$0xff]
    %v43 = vld [vmem:[%s5 + $0x68] sm:$0xff]
    %v44 = vld [vmem:[%s5 + $0x70] sm:$0xff]
    %v45 = vld [vmem:[%s5 + $0x78] sm:$0xff]
    %v46 = vld [vmem:[%s6] sm:$0x1]
    %v47 = vld [vmem:[%s0] sm:$0xff]
    %v48 = vld [vmem:[%s0 + $0x8] sm:$0xff]
    %v49 = vld [vmem:[%s0 + $0x10] sm:$0xff]
    %v50 = vld [vmem:[%s0 + $0x18] sm:$0xff]
    %v51 = vld [vmem:[%s0 + $0x20] sm:$0xff]
    %v52 = vld [vmem:[%s0 + $0x28] sm:$0xff]
    %v53 = vld [vmem:[%s0 + $0x30] sm:$0xff]
    %v54 = vld [vmem:[%s0 + $0x38] sm:$0xff]
    %v55 = vld [vmem:[%s0 + $0x40] sm:$0xff]
    %v56 = vld [vmem:[%s0 + $0x48] sm:$0xff]
    %v57 = vld [vmem:[%s0 + $0x50] sm:$0xff]
    %v58 = vld [vmem:[%s0 + $0x58] sm:$0xff]
    %v59 = vld [vmem:[%s0 + $0x60] sm:$0xff]
    %v60 = vld [vmem:[%s0 + $0x68] sm:$0xff]
    %v61 = vld [vmem:[%s0 + $0x70] sm:$0xff]
    %v62 = vld [vmem:[%s0 + $0x78] sm:$0xff]
    %v63 = vld [vmem:[%s0 + $0x80] sm:$0xff]
    %v64 = vld [vmem:[%s0 + $0x88] sm:$0xff]
    %v65 = vld [vmem:[%s0 + $0x90] sm:$0xff]
    %v66 = vld [vmem:[%s0 + $0x98] sm:$0xff]
    %v67 = vld [vmem:[%s0 + $0xa0] sm:$0xff]
    %v68 = vld [vmem:[%s0 + $0xa8] sm:$0xff]
    %v69 = vld [vmem:[%s0 + $0xb0] sm:$0xff]
    %v70 = vld [vmem:[%s0 + $0xb8] sm:$0xff]
    %v71 = vld [vmem:[%s0 + $0xc0] sm:$0xff]
    %v72 = vld [vmem:[%s0 + $0xc8] sm:$0xff]
    %v73 = vld [vmem:[%s0 + $0xd0] sm:$0xff]
    %v74 = vld [vmem:[%s0 + $0xd8] sm:$0xff]
    %v75 = vld [vmem:[%s0 + $0xe0] sm:$0xff]
    %v76 = vld [vmem:[%s0 + $0xe8] sm:$0xff]
    %v77 = vld [vmem:[%s0 + $0xf0] sm:$0xff]
    %v78 = vld [vmem:[%s0 + $0xf8] sm:$0xff]
    %v79 = vld [vmem:[%s0 + $0x100] sm:$0xff]
    %v80 = vld [vmem:[%s0 + $0x108] sm:$0xff]
    %v81 = vld [vmem:[%s0 + $0x110] sm:$0xff]
    %v82 = vld [vmem:[%s0 + $0x118] sm:$0xff]
    %v83 = vld [vmem:[%s0 + $0x120] sm:$0xff]
    %v84 = vld [vmem:[%s0 + $0x128] sm:$0xff]
    %v85 = vld [vmem:[%s0 + $0x130] sm:$0xff]
    %v86 = vld [vmem:[%s0 + $0x138] sm:$0xff]
    %v87 = vld [vmem:[%s0 + $0x140] sm:$0xff]
    %v88 = vld [vmem:[%s0 + $0x148] sm:$0xff]
    %v89 = vld [vmem:[%s0 + $0x150] sm:$0xff]
    %v90 = vld [vmem:[%s0 + $0x158] sm:$0xff]
    %v91 = vld [vmem:[%s0 + $0x160] sm:$0xff]
    %v92 = vld [vmem:[%s0 + $0x168] sm:$0xff]
    %v93 = vld [vmem:[%s0 + $0x170] sm:$0xff]
    %v94 = vld [vmem:[%s0 + $0x178] sm:$0xff]
    %v95 = vld [vmem:[%s0 + $0x180] sm:$0xff]
    %v96 = vld [vmem:[%s0 + $0x188] sm:$0xff]
    %v97 = vld [vmem:[%s0 + $0x190] sm:$0xff]
    %v98 = vld [vmem:[%s0 + $0x198] sm:$0xff]
    %v99 = vld [vmem:[%s0 + $0x1a0] sm:$0xff]
    %v100 = vld [vmem:[%s0 + $0x1a8] sm:$0xff]
    %v101 = vld [vmem:[%s0 + $0x1b0] sm:$0xff]
    %v102 = vld [vmem:[%s0 + $0x1b8] sm:$0xff]
    %v103 = vld [vmem:[%s0 + $0x1c0] sm:$0xff]
    %v104 = vld [vmem:[%s0 + $0x1c8] sm:$0xff]
    %v105 = vld [vmem:[%s0 + $0x1d0] sm:$0xff]
    %v106 = vld [vmem:[%s0 + $0x1d8] sm:$0xff]
    %v107 = vld [vmem:[%s0 + $0x1e0] sm:$0xff]
    %v108 = vld [vmem:[%s0 + $0x1e8] sm:$0xff]
    %v109 = vld [vmem:[%s0 + $0x1f0] sm:$0xff]
    %v110 = vld [vmem:[%s0 + $0x1f8] sm:$0xff]
    %112 = vset.pattern.permute.xlu0 0
    %113 = vperm.xlu0 %112, %v28
    %v114 = vpop.permute.xlu0 %113
    %116 = vmatpush.msra.mxu0 %v107
    %117 = vmatpush.msra.mxu0 %v103
    %118 = vmatpush.msra.mxu0 %v99
    %119 = vmatpush.msra.mxu0 %v95
    %120 = vmatpush.msra.mxu0 %v91
    %121 = vmatpush.msra.mxu0 %v87
    %122 = vmatpush.msra.mxu0 %v83
    %123 = vmatpush.msra.mxu0 %v79
    %124 = vmatpush.msra.mxu0 %v75
    %125 = vmatpush.msra.mxu0 %v71
    %126 = vmatpush.msra.mxu0 %v67
    %127 = vmatpush.msra.mxu0 %v63
    %128 = vmatpush.msra.mxu0 %v59
    %129 = vmatpush.msra.mxu0 %v55
    %130 = vmatpush.msra.mxu0 %v51
    %131 = vmatpush.msra.mxu0 %v47
    %132 = vmatmul.f32.gmra.mxu0 %v27
    %v133 = vpop.f32.mrf.mxu0
    %v134 = vadd.f32 %v114, %v133
    %135 = vdwg.mxu0
    %136 = vmatpush.msra.mxu0 %v108
    %137 = vmatpush.msra.mxu0 %v104
    %138 = vmatpush.msra.mxu0 %v100
    %139 = vmatpush.msra.mxu0 %v96
    %140 = vmatpush.msra.mxu0 %v92
    %141 = vmatpush.msra.mxu0 %v88
    %142 = vmatpush.msra.mxu0 %v84
    %143 = vmatpush.msra.mxu0 %v80
    %144 = vmatpush.msra.mxu0 %v76
    %145 = vmatpush.msra.mxu0 %v72
    %146 = vmatpush.msra.mxu0 %v68
    %147 = vmatpush.msra.mxu0 %v64
    %148 = vmatpush.msra.mxu0 %v60
    %149 = vmatpush.msra.mxu0 %v56
    %150 = vmatpush.msra.mxu0 %v52
    %151 = vmatpush.msra.mxu0 %v48
    %152 = vmatmul.f32.gmra.mxu0 %v27
    %v153 = vpop.f32.mrf.mxu0
    %v154 = vadd.f32 %v114, %v153
    %155 = vdwg.mxu0
    %156 = vmatpush.msra.mxu0 %v109
    %157 = vmatpush.msra.mxu0 %v105
    %158 = vmatpush.msra.mxu0 %v101
    %159 = vmatpush.msra.mxu0 %v97
    %160 = vmatpush.msra.mxu0 %v93
    %161 = vmatpush.msra.mxu0 %v89
    %162 = vmatpush.msra.mxu0 %v85
    %163 = vmatpush.msra.mxu0 %v81
    %164 = vmatpush.msra.mxu0 %v77
    %165 = vmatpush.msra.mxu0 %v73
    %166 = vmatpush.msra.mxu0 %v69
    %167 = vmatpush.msra.mxu0 %v65
    %168 = vmatpush.msra.mxu0 %v61
    %169 = vmatpush.msra.mxu0 %v57
    %170 = vmatpush.msra.mxu0 %v53
    %171 = vmatpush.msra.mxu0 %v49
    %172 = vmatmul.f32.gmra.mxu0 %v27
    %v173 = vpop.f32.mrf.mxu0
    %v174 = vadd.f32 %v114, %v173
    %175 = vdwg.mxu0
    %176 = vmatpush.msra.mxu0 %v110
    %177 = vmatpush.msra.mxu0 %v106
    %178 = vmatpush.msra.mxu0 %v102
    %179 = vmatpush.msra.mxu0 %v98
    %180 = vmatpush.msra.mxu0 %v94
    %181 = vmatpush.msra.mxu0 %v90
    %182 = vmatpush.msra.mxu0 %v86
    %183 = vmatpush.msra.mxu0 %v82
    %184 = vmatpush.msra.mxu0 %v78
    %185 = vmatpush.msra.mxu0 %v74
    %186 = vmatpush.msra.mxu0 %v70
    %187 = vmatpush.msra.mxu0 %v66
    %188 = vmatpush.msra.mxu0 %v62
    %189 = vmatpush.msra.mxu0 %v58
    %190 = vmatpush.msra.mxu0 %v54
    %191 = vmatpush.msra.mxu0 %v50
    %192 = vmatmul.f32.gmra.mxu0 %v27
    %v193 = vpop.f32.mrf.mxu0
    %v194 = vadd.f32 %v114, %v193
    %195 = vdwg.mxu0
    %v196 = vmax.f32 %v134, 0.0
    %v197 = vmax.f32 %v154, 0.0
    %v198 = vmax.f32 %v174, 0.0
    %v199 = vmax.f32 %v194, 0.0
    %v200 = vld [vmem:[%s3] sm:$0xff]
    %v201 = vld [vmem:[%s3 + $0x8] sm:$0xff]
    %v202 = vld [vmem:[%s3 + $0x10] sm:$0xff]
    %v203 = vld [vmem:[%s3 + $0x18] sm:$0xff]
    %v204 = vld [vmem:[%s3 + $0x20] sm:$0xff]
    %v205 = vld [vmem:[%s3 + $0x28] sm:$0xff]
    %v206 = vld [vmem:[%s3 + $0x30] sm:$0xff]
    %v207 = vld [vmem:[%s3 + $0x38] sm:$0xff]
    %v208 = vld [vmem:[%s3 + $0x40] sm:$0xff]
    %v209 = vld [vmem:[%s3 + $0x48] sm:$0xff]
    %v210 = vld [vmem:[%s3 + $0x50] sm:$0xff]
    %v211 = vld [vmem:[%s3 + $0x58] sm:$0xff]
    %v212 = vld [vmem:[%s3 + $0x60] sm:$0xff]
    %v213 = vld [vmem:[%s3 + $0x68] sm:$0xff]
    %v214 = vld [vmem:[%s3 + $0x70] sm:$0xff]
    %v215 = vld [vmem:[%s3 + $0x78] sm:$0xff]
    %v216 = vld [vmem:[%s3 + $0x80] sm:$0xff]
    %v217 = vld [vmem:[%s3 + $0x88] sm:$0xff]
    %v218 = vld [vmem:[%s3 + $0x90] sm:$0xff]
    %v219 = vld [vmem:[%s3 + $0x98] sm:$0xff]
    %v220 = vld [vmem:[%s3 + $0xa0] sm:$0xff]
    %v221 = vld [vmem:[%s3 + $0xa8] sm:$0xff]
    %v222 = vld [vmem:[%s3 + $0xb0] sm:$0xff]
    %v223 = vld [vmem:[%s3 + $0xb8] sm:$0xff]
    %v224 = vld [vmem:[%s3 + $0xc0] sm:$0xff]
    %v225 = vld [vmem:[%s3 + $0xc8] sm:$0xff]
    %v226 = vld [vmem:[%s3 + $0xd0] sm:$0xff]
    %v227 = vld [vmem:[%s3 + $0xd8] sm:$0xff]
    %v228 = vld [vmem:[%s3 + $0xe0] sm:$0xff]
    %v229 = vld [vmem:[%s3 + $0xe8] sm:$0xff]
    %v230 = vld [vmem:[%s3 + $0xf0] sm:$0xff]
    %v231 = vld [vmem:[%s3 + $0xf8] sm:$0xff]
    %232 = vmatpush.msra.mxu0 %v215
    %233 = vmatpush.msra.mxu0 %v214
    %234 = vmatpush.msra.mxu0 %v213
    %235 = vmatpush.msra.mxu0 %v212
    %236 = vmatpush.msra.mxu0 %v211
    %237 = vmatpush.msra.mxu0 %v210
    %238 = vmatpush.msra.mxu0 %v209
    %239 = vmatpush.msra.mxu0 %v208
    %240 = vmatpush.msra.mxu0 %v207
    %241 = vmatpush.msra.mxu0 %v206
    %242 = vmatpush.msra.mxu0 %v205
    %243 = vmatpush.msra.mxu0 %v204
    %244 = vmatpush.msra.mxu0 %v203
    %245 = vmatpush.msra.mxu0 %v202
    %246 = vmatpush.msra.mxu0 %v201
    %247 = vmatpush.msra.mxu0 %v200
    %248 = vmatmul.f32.gmra.mxu0 %v196
    %v249 = vpop.f32.mrf.mxu0
    %v250 = vadd.f32 0.0, %v249
    %251 = vdwg.mxu0
    %252 = vmatpush.msra.mxu0 %v231
    %253 = vmatpush.msra.mxu0 %v230
    %254 = vmatpush.msra.mxu0 %v229
    %255 = vmatpush.msra.mxu0 %v228
    %256 = vmatpush.msra.mxu0 %v227
    %257 = vmatpush.msra.mxu0 %v226
    %258 = vmatpush.msra.mxu0 %v225
    %259 = vmatpush.msra.mxu0 %v224
    %260 = vmatpush.msra.mxu0 %v223
    %261 = vmatpush.msra.mxu0 %v222
    %262 = vmatpush.msra.mxu0 %v221
    %263 = vmatpush.msra.mxu0 %v220
    %264 = vmatpush.msra.mxu0 %v219
    %265 = vmatpush.msra.mxu0 %v218
    %266 = vmatpush.msra.mxu0 %v217
    %267 = vmatpush.msra.mxu0 %v216
    %268 = vmatmul.f32.gmra.mxu0 %v197
    %v269 = vpop.f32.mrf.mxu0
    %v270 = vadd.f32 %v250, %v269
    %271 = vdwg.mxu0
    %v272 = vadd.f32 %v29, %v270
    %273 = vmatpush.msra.mxu0 %v215
    %274 = vmatpush.msra.mxu0 %v214
    %275 = vmatpush.msra.mxu0 %v213
    %276 = vmatpush.msra.mxu0 %v212
    %277 = vmatpush.msra.mxu0 %v211
    %278 = vmatpush.msra.mxu0 %v210
    %279 = vmatpush.msra.mxu0 %v209
    %280 = vmatpush.msra.mxu0 %v208
    %281 = vmatpush.msra.mxu0 %v207
    %282 = vmatpush.msra.mxu0 %v206
    %283 = vmatpush.msra.mxu0 %v205
    %284 = vmatpush.msra.mxu0 %v204
    %285 = vmatpush.msra.mxu0 %v203
    %286 = vmatpush.msra.mxu0 %v202
    %287 = vmatpush.msra.mxu0 %v201
    %288 = vmatpush.msra.mxu0 %v200
    %289 = vmatmul.f32.gmra.mxu0 %v198
    %v290 = vpop.f32.mrf.mxu0
    %v291 = vadd.f32 0.0, %v290
    %292 = vdwg.mxu0
    %293 = vmatpush.msra.mxu0 %v231
    %294 = vmatpush.msra.mxu0 %v230
    %295 = vmatpush.msra.mxu0 %v229
    %296 = vmatpush.msra.mxu0 %v228
    %297 = vmatpush.msra.mxu0 %v227
    %298 = vmatpush.msra.mxu0 %v226
    %299 = vmatpush.msra.mxu0 %v225
    %300 = vmatpush.msra.mxu0 %v224
    %301 = vmatpush.msra.mxu0 %v223
    %302 = vmatpush.msra.mxu0 %v222
    %303 = vmatpush.msra.mxu0 %v221
    %304 = vmatpush.msra.mxu0 %v220
    %305 = vmatpush.msra.mxu0 %v219
    %306 = vmatpush.msra.mxu0 %v218
    %307 = vmatpush.msra.mxu0 %v217
    %308 = vmatpush.msra.mxu0 %v216
    %309 = vmatmul.f32.gmra.mxu0 %v199
    %v310 = vpop.f32.mrf.mxu0
    %v311 = vadd.f32 %v291, %v310
    %312 = vdwg.mxu0
    %v313 = vadd.f32 %v29, %v311
    %s314 = scalar_lea.vmem %s3, 256
    %v315 = vld [vmem:[%s314] sm:$0xff]
    %v316 = vld [vmem:[%s314 + $0x8] sm:$0xff]
    %v317 = vld [vmem:[%s314 + $0x10] sm:$0xff]
    %v318 = vld [vmem:[%s314 + $0x18] sm:$0xff]
    %v319 = vld [vmem:[%s314 + $0x20] sm:$0xff]
    %v320 = vld [vmem:[%s314 + $0x28] sm:$0xff]
    %v321 = vld [vmem:[%s314 + $0x30] sm:$0xff]
    %v322 = vld [vmem:[%s314 + $0x38] sm:$0xff]
    %v323 = vld [vmem:[%s314 + $0x40] sm:$0xff]
    %v324 = vld [vmem:[%s314 + $0x48] sm:$0xff]
    %v325 = vld [vmem:[%s314 + $0x50] sm:$0xff]
    %v326 = vld [vmem:[%s314 + $0x58] sm:$0xff]
    %v327 = vld [vmem:[%s314 + $0x60] sm:$0xff]
    %v328 = vld [vmem:[%s314 + $0x68] sm:$0xff]
    %v329 = vld [vmem:[%s314 + $0x70] sm:$0xff]
    %v330 = vld [vmem:[%s314 + $0x78] sm:$0xff]
    %v331 = vld [vmem:[%s314 + $0x80] sm:$0xff]
    %v332 = vld [vmem:[%s314 + $0x88] sm:$0xff]
    %v333 = vld [vmem:[%s314 + $0x90] sm:$0xff]
    %v334 = vld [vmem:[%s314 + $0x98] sm:$0xff]
    %v335 = vld [vmem:[%s314 + $0xa0] sm:$0xff]
    %v336 = vld [vmem:[%s314 + $0xa8] sm:$0xff]
    %v337 = vld [vmem:[%s314 + $0xb0] sm:$0xff]
    %v338 = vld [vmem:[%s314 + $0xb8] sm:$0xff]
    %v339 = vld [vmem:[%s314 + $0xc0] sm:$0xff]
    %v340 = vld [vmem:[%s314 + $0xc8] sm:$0xff]
    %v341 = vld [vmem:[%s314 + $0xd0] sm:$0xff]
    %v342 = vld [vmem:[%s314 + $0xd8] sm:$0xff]
    %v343 = vld [vmem:[%s314 + $0xe0] sm:$0xff]
    %v344 = vld [vmem:[%s314 + $0xe8] sm:$0xff]
    %v345 = vld [vmem:[%s314 + $0xf0] sm:$0xff]
    %v346 = vld [vmem:[%s314 + $0xf8] sm:$0xff]
    %v349 = vrot.slane %v196, 1
    %v350 = vrot.slane %v197, 1
    %353 = vmatpush.msra.mxu0 %v330
    %354 = vmatpush.msra.mxu0 %v329
    %355 = vmatpush.msra.mxu0 %v328
    %356 = vmatpush.msra.mxu0 %v327
    %357 = vmatpush.msra.mxu0 %v326
    %358 = vmatpush.msra.mxu0 %v325
    %359 = vmatpush.msra.mxu0 %v324
    %360 = vmatpush.msra.mxu0 %v323
    %361 = vmatpush.msra.mxu0 %v322
    %362 = vmatpush.msra.mxu0 %v321
    %363 = vmatpush.msra.mxu0 %v320
    %364 = vmatpush.msra.mxu0 %v319
    %365 = vmatpush.msra.mxu0 %v318
    %366 = vmatpush.msra.mxu0 %v317
    %367 = vmatpush.msra.mxu0 %v316
    %368 = vmatpush.msra.mxu0 %v315
    %369 = vmatmul.f32.gmra.mxu0 %v349
    %v370 = vpop.f32.mrf.mxu0
    %v371 = vadd.f32 0.0, %v370
    %372 = vdwg.mxu0
    %373 = vmatpush.msra.mxu0 %v346
    %374 = vmatpush.msra.mxu0 %v345
    %375 = vmatpush.msra.mxu0 %v344
    %376 = vmatpush.msra.mxu0 %v343
    %377 = vmatpush.msra.mxu0 %v342
    %378 = vmatpush.msra.mxu0 %v341
    %379 = vmatpush.msra.mxu0 %v340
    %380 = vmatpush.msra.mxu0 %v339
    %381 = vmatpush.msra.mxu0 %v338
    %382 = vmatpush.msra.mxu0 %v337
    %383 = vmatpush.msra.mxu0 %v336
    %384 = vmatpush.msra.mxu0 %v335
    %385 = vmatpush.msra.mxu0 %v334
    %386 = vmatpush.msra.mxu0 %v333
    %387 = vmatpush.msra.mxu0 %v332
    %388 = vmatpush.msra.mxu0 %v331
    %389 = vmatmul.f32.gmra.mxu0 %v350
    %v390 = vpop.f32.mrf.mxu0
    %v391 = vadd.f32 %v371, %v390
    %392 = vdwg.mxu0
    %v393 = vadd.f32 %v272, %v391
    %v396 = vrot.slane %v198, 1
    %v397 = vrot.slane %v199, 1
    %400 = vmatpush.msra.mxu0 %v330
    %401 = vmatpush.msra.mxu0 %v329
    %402 = vmatpush.msra.mxu0 %v328
    %403 = vmatpush.msra.mxu0 %v327
    %404 = vmatpush.msra.mxu0 %v326
    %405 = vmatpush.msra.mxu0 %v325
    %406 = vmatpush.msra.mxu0 %v324
    %407 = vmatpush.msra.mxu0 %v323
    %408 = vmatpush.msra.mxu0 %v322
    %409 = vmatpush.msra.mxu0 %v321
    %410 = vmatpush.msra.mxu0 %v320
    %411 = vmatpush.msra.mxu0 %v319
    %412 = vmatpush.msra.mxu0 %v318
    %413 = vmatpush.msra.mxu0 %v317
    %414 = vmatpush.msra.mxu0 %v316
    %415 = vmatpush.msra.mxu0 %v315
    %416 = vmatmul.f32.gmra.mxu0 %v396
    %v417 = vpop.f32.mrf.mxu0
    %v418 = vadd.f32 0.0, %v417
    %419 = vdwg.mxu0
    %420 = vmatpush.msra.mxu0 %v346
    %421 = vmatpush.msra.mxu0 %v345
    %422 = vmatpush.msra.mxu0 %v344
    %423 = vmatpush.msra.mxu0 %v343
    %424 = vmatpush.msra.mxu0 %v342
    %425 = vmatpush.msra.mxu0 %v341
    %426 = vmatpush.msra.mxu0 %v340
    %427 = vmatpush.msra.mxu0 %v339
    %428 = vmatpush.msra.mxu0 %v338
    %429 = vmatpush.msra.mxu0 %v337
    %430 = vmatpush.msra.mxu0 %v336
    %431 = vmatpush.msra.mxu0 %v335
    %432 = vmatpush.msra.mxu0 %v334
    %433 = vmatpush.msra.mxu0 %v333
    %434 = vmatpush.msra.mxu0 %v332
    %435 = vmatpush.msra.mxu0 %v331
    %436 = vmatmul.f32.gmra.mxu0 %v397
    %v437 = vpop.f32.mrf.mxu0
    %v438 = vadd.f32 %v418, %v437
    %439 = vdwg.mxu0
    %v440 = vadd.f32 %v313, %v438
    %s441 = scalar_lea.vmem %s3, 512
    %v442 = vld [vmem:[%s441] sm:$0xff]
    %v443 = vld [vmem:[%s441 + $0x8] sm:$0xff]
    %v444 = vld [vmem:[%s441 + $0x10] sm:$0xff]
    %v445 = vld [vmem:[%s441 + $0x18] sm:$0xff]
    %v446 = vld [vmem:[%s441 + $0x20] sm:$0xff]
    %v447 = vld [vmem:[%s441 + $0x28] sm:$0xff]
    %v448 = vld [vmem:[%s441 + $0x30] sm:$0xff]
    %v449 = vld [vmem:[%s441 + $0x38] sm:$0xff]
    %v450 = vld [vmem:[%s441 + $0x40] sm:$0xff]
    %v451 = vld [vmem:[%s441 + $0x48] sm:$0xff]
    %v452 = vld [vmem:[%s441 + $0x50] sm:$0xff]
    %v453 = vld [vmem:[%s441 + $0x58] sm:$0xff]
    %v454 = vld [vmem:[%s441 + $0x60] sm:$0xff]
    %v455 = vld [vmem:[%s441 + $0x68] sm:$0xff]
    %v456 = vld [vmem:[%s441 + $0x70] sm:$0xff]
    %v457 = vld [vmem:[%s441 + $0x78] sm:$0xff]
    %v458 = vld [vmem:[%s441 + $0x80] sm:$0xff]
    %v459 = vld [vmem:[%s441 + $0x88] sm:$0xff]
    %v460 = vld [vmem:[%s441 + $0x90] sm:$0xff]
    %v461 = vld [vmem:[%s441 + $0x98] sm:$0xff]
    %v462 = vld [vmem:[%s441 + $0xa0] sm:$0xff]
    %v463 = vld [vmem:[%s441 + $0xa8] sm:$0xff]
    %v464 = vld [vmem:[%s441 + $0xb0] sm:$0xff]
    %v465 = vld [vmem:[%s441 + $0xb8] sm:$0xff]
    %v466 = vld [vmem:[%s441 + $0xc0] sm:$0xff]
    %v467 = vld [vmem:[%s441 + $0xc8] sm:$0xff]
    %v468 = vld [vmem:[%s441 + $0xd0] sm:$0xff]
    %v469 = vld [vmem:[%s441 + $0xd8] sm:$0xff]
    %v470 = vld [vmem:[%s441 + $0xe0] sm:$0xff]
    %v471 = vld [vmem:[%s441 + $0xe8] sm:$0xff]
    %v472 = vld [vmem:[%s441 + $0xf0] sm:$0xff]
    %v473 = vld [vmem:[%s441 + $0xf8] sm:$0xff]
    %v474 = vrot.slane %v196, 2
    %v475 = vrot.slane %v197, 2
    %478 = vmatpush.msra.mxu0 %v457
    %479 = vmatpush.msra.mxu0 %v456
    %480 = vmatpush.msra.mxu0 %v455
    %481 = vmatpush.msra.mxu0 %v454
    %482 = vmatpush.msra.mxu0 %v453
    %483 = vmatpush.msra.mxu0 %v452
    %484 = vmatpush.msra.mxu0 %v451
    %485 = vmatpush.msra.mxu0 %v450
    %486 = vmatpush.msra.mxu0 %v449
    %487 = vmatpush.msra.mxu0 %v448
    %488 = vmatpush.msra.mxu0 %v447
    %489 = vmatpush.msra.mxu0 %v446
    %490 = vmatpush.msra.mxu0 %v445
    %491 = vmatpush.msra.mxu0 %v444
    %492 = vmatpush.msra.mxu0 %v443
    %493 = vmatpush.msra.mxu0 %v442
    %494 = vmatmul.f32.gmra.mxu0 %v474
    %v495 = vpop.f32.mrf.mxu0
    %v496 = vadd.f32 0.0, %v495
    %497 = vdwg.mxu0
    %498 = vmatpush.msra.mxu0 %v473
    %499 = vmatpush.msra.mxu0 %v472
    %500 = vmatpush.msra.mxu0 %v471
    %501 = vmatpush.msra.mxu0 %v470
    %502 = vmatpush.msra.mxu0 %v469
    %503 = vmatpush.msra.mxu0 %v468
    %504 = vmatpush.msra.mxu0 %v467
    %505 = vmatpush.msra.mxu0 %v466
    %506 = vmatpush.msra.mxu0 %v465
    %507 = vmatpush.msra.mxu0 %v464
    %508 = vmatpush.msra.mxu0 %v463
    %509 = vmatpush.msra.mxu0 %v462
    %510 = vmatpush.msra.mxu0 %v461
    %511 = vmatpush.msra.mxu0 %v460
    %512 = vmatpush.msra.mxu0 %v459
    %513 = vmatpush.msra.mxu0 %v458
    %514 = vmatmul.f32.gmra.mxu0 %v475
    %v515 = vpop.f32.mrf.mxu0
    %v516 = vadd.f32 %v496, %v515
    %517 = vdwg.mxu0
    %v518 = vadd.f32 %v393, %v516
    %v519 = vrot.slane %v198, 2
    %v520 = vrot.slane %v199, 2
    %523 = vmatpush.msra.mxu0 %v457
    %524 = vmatpush.msra.mxu0 %v456
    %525 = vmatpush.msra.mxu0 %v455
    %526 = vmatpush.msra.mxu0 %v454
    %527 = vmatpush.msra.mxu0 %v453
    %528 = vmatpush.msra.mxu0 %v452
    %529 = vmatpush.msra.mxu0 %v451
    %530 = vmatpush.msra.mxu0 %v450
    %531 = vmatpush.msra.mxu0 %v449
    %532 = vmatpush.msra.mxu0 %v448
    %533 = vmatpush.msra.mxu0 %v447
    %534 = vmatpush.msra.mxu0 %v446
    %535 = vmatpush.msra.mxu0 %v445
    %536 = vmatpush.msra.mxu0 %v444
    %537 = vmatpush.msra.mxu0 %v443
    %538 = vmatpush.msra.mxu0 %v442
    %539 = vmatmul.f32.gmra.mxu0 %v519
    %v540 = vpop.f32.mrf.mxu0
    %v541 = vadd.f32 0.0, %v540
    %542 = vdwg.mxu0
    %543 = vmatpush.msra.mxu0 %v473
    %544 = vmatpush.msra.mxu0 %v472
    %545 = vmatpush.msra.mxu0 %v471
    %546 = vmatpush.msra.mxu0 %v470
    %547 = vmatpush.msra.mxu0 %v469
    %548 = vmatpush.msra.mxu0 %v468
    %549 = vmatpush.msra.mxu0 %v467
    %550 = vmatpush.msra.mxu0 %v466
    %551 = vmatpush.msra.mxu0 %v465
    %552 = vmatpush.msra.mxu0 %v464
    %553 = vmatpush.msra.mxu0 %v463
    %554 = vmatpush.msra.mxu0 %v462
    %555 = vmatpush.msra.mxu0 %v461
    %556 = vmatpush.msra.mxu0 %v460
    %557 = vmatpush.msra.mxu0 %v459
    %558 = vmatpush.msra.mxu0 %v458
    %559 = vmatmul.f32.gmra.mxu0 %v520
    %v560 = vpop.f32.mrf.mxu0
    %v561 = vadd.f32 %v541, %v560
    %562 = vdwg.mxu0
    %v563 = vadd.f32 %v440, %v561
    %s564 = scalar_lea.vmem %s3, 768
    %v565 = vld [vmem:[%s564] sm:$0xff]
    %v566 = vld [vmem:[%s564 + $0x8] sm:$0xff]
    %v567 = vld [vmem:[%s564 + $0x10] sm:$0xff]
    %v568 = vld [vmem:[%s564 + $0x18] sm:$0xff]
    %v569 = vld [vmem:[%s564 + $0x20] sm:$0xff]
    %v570 = vld [vmem:[%s564 + $0x28] sm:$0xff]
    %v571 = vld [vmem:[%s564 + $0x30] sm:$0xff]
    %v572 = vld [vmem:[%s564 + $0x38] sm:$0xff]
    %v573 = vld [vmem:[%s564 + $0x40] sm:$0xff]
    %v574 = vld [vmem:[%s564 + $0x48] sm:$0xff]
    %v575 = vld [vmem:[%s564 + $0x50] sm:$0xff]
    %v576 = vld [vmem:[%s564 + $0x58] sm:$0xff]
    %v577 = vld [vmem:[%s564 + $0x60] sm:$0xff]
    %v578 = vld [vmem:[%s564 + $0x68] sm:$0xff]
    %v579 = vld [vmem:[%s564 + $0x70] sm:$0xff]
    %v580 = vld [vmem:[%s564 + $0x78] sm:$0xff]
    %v581 = vld [vmem:[%s564 + $0x80] sm:$0xff]
    %v582 = vld [vmem:[%s564 + $0x88] sm:$0xff]
    %v583 = vld [vmem:[%s564 + $0x90] sm:$0xff]
    %v584 = vld [vmem:[%s564 + $0x98] sm:$0xff]
    %v585 = vld [vmem:[%s564 + $0xa0] sm:$0xff]
    %v586 = vld [vmem:[%s564 + $0xa8] sm:$0xff]
    %v587 = vld [vmem:[%s564 + $0xb0] sm:$0xff]
    %v588 = vld [vmem:[%s564 + $0xb8] sm:$0xff]
    %v589 = vld [vmem:[%s564 + $0xc0] sm:$0xff]
    %v590 = vld [vmem:[%s564 + $0xc8] sm:$0xff]
    %v591 = vld [vmem:[%s564 + $0xd0] sm:$0xff]
    %v592 = vld [vmem:[%s564 + $0xd8] sm:$0xff]
    %v593 = vld [vmem:[%s564 + $0xe0] sm:$0xff]
    %v594 = vld [vmem:[%s564 + $0xe8] sm:$0xff]
    %v595 = vld [vmem:[%s564 + $0xf0] sm:$0xff]
    %v596 = vld [vmem:[%s564 + $0xf8] sm:$0xff]
    %v597 = vrot.slane %v196, 3
    %v598 = vrot.slane %v197, 3
    %601 = vmatpush.msra.mxu0 %v580
    %602 = vmatpush.msra.mxu0 %v579
    %603 = vmatpush.msra.mxu0 %v578
    %604 = vmatpush.msra.mxu0 %v577
    %605 = vmatpush.msra.mxu0 %v576
    %606 = vmatpush.msra.mxu0 %v575
    %607 = vmatpush.msra.mxu0 %v574
    %608 = vmatpush.msra.mxu0 %v573
    %609 = vmatpush.msra.mxu0 %v572
    %610 = vmatpush.msra.mxu0 %v571
    %611 = vmatpush.msra.mxu0 %v570
    %612 = vmatpush.msra.mxu0 %v569
    %613 = vmatpush.msra.mxu0 %v568
    %614 = vmatpush.msra.mxu0 %v567
    %615 = vmatpush.msra.mxu0 %v566
    %616 = vmatpush.msra.mxu0 %v565
    %617 = vmatmul.f32.gmra.mxu0 %v597
    %v618 = vpop.f32.mrf.mxu0
    %v619 = vadd.f32 0.0, %v618
    %620 = vdwg.mxu0
    %621 = vmatpush.msra.mxu0 %v596
    %622 = vmatpush.msra.mxu0 %v595
    %623 = vmatpush.msra.mxu0 %v594
    %624 = vmatpush.msra.mxu0 %v593
    %625 = vmatpush.msra.mxu0 %v592
    %626 = vmatpush.msra.mxu0 %v591
    %627 = vmatpush.msra.mxu0 %v590
    %628 = vmatpush.msra.mxu0 %v589
    %629 = vmatpush.msra.mxu0 %v588
    %630 = vmatpush.msra.mxu0 %v587
    %631 = vmatpush.msra.mxu0 %v586
    %632 = vmatpush.msra.mxu0 %v585
    %633 = vmatpush.msra.mxu0 %v584
    %634 = vmatpush.msra.mxu0 %v583
    %635 = vmatpush.msra.mxu0 %v582
    %636 = vmatpush.msra.mxu0 %v581
    %637 = vmatmul.f32.gmra.mxu0 %v598
    %v638 = vpop.f32.mrf.mxu0
    %v639 = vadd.f32 %v619, %v638
    %640 = vdwg.mxu0
    %v641 = vadd.f32 %v518, %v639
    %v642 = vrot.slane %v198, 3
    %v643 = vrot.slane %v199, 3
    %646 = vmatpush.msra.mxu0 %v580
    %647 = vmatpush.msra.mxu0 %v579
    %648 = vmatpush.msra.mxu0 %v578
    %649 = vmatpush.msra.mxu0 %v577
    %650 = vmatpush.msra.mxu0 %v576
    %651 = vmatpush.msra.mxu0 %v575
    %652 = vmatpush.msra.mxu0 %v574
    %653 = vmatpush.msra.mxu0 %v573
    %654 = vmatpush.msra.mxu0 %v572
    %655 = vmatpush.msra.mxu0 %v571
    %656 = vmatpush.msra.mxu0 %v570
    %657 = vmatpush.msra.mxu0 %v569
    %658 = vmatpush.msra.mxu0 %v568
    %659 = vmatpush.msra.mxu0 %v567
    %660 = vmatpush.msra.mxu0 %v566
    %661 = vmatpush.msra.mxu0 %v565
    %662 = vmatmul.f32.gmra.mxu0 %v642
    %v663 = vpop.f32.mrf.mxu0
    %v664 = vadd.f32 0.0, %v663
    %665 = vdwg.mxu0
    %666 = vmatpush.msra.mxu0 %v596
    %667 = vmatpush.msra.mxu0 %v595
    %668 = vmatpush.msra.mxu0 %v594
    %669 = vmatpush.msra.mxu0 %v593
    %670 = vmatpush.msra.mxu0 %v592
    %671 = vmatpush.msra.mxu0 %v591
    %672 = vmatpush.msra.mxu0 %v590
    %673 = vmatpush.msra.mxu0 %v589
    %674 = vmatpush.msra.mxu0 %v588
    %675 = vmatpush.msra.mxu0 %v587
    %676 = vmatpush.msra.mxu0 %v586
    %677 = vmatpush.msra.mxu0 %v585
    %678 = vmatpush.msra.mxu0 %v584
    %679 = vmatpush.msra.mxu0 %v583
    %680 = vmatpush.msra.mxu0 %v582
    %681 = vmatpush.msra.mxu0 %v581
    %682 = vmatmul.f32.gmra.mxu0 %v643
    %v683 = vpop.f32.mrf.mxu0
    %v684 = vadd.f32 %v664, %v683
    %685 = vdwg.mxu0
    %v686 = vadd.f32 %v563, %v684
    %s687 = scalar_lea.vmem %s3, 1024
    %v688 = vld [vmem:[%s687] sm:$0xff]
    %v689 = vld [vmem:[%s687 + $0x8] sm:$0xff]
    %v690 = vld [vmem:[%s687 + $0x10] sm:$0xff]
    %v691 = vld [vmem:[%s687 + $0x18] sm:$0xff]
    %v692 = vld [vmem:[%s687 + $0x20] sm:$0xff]
    %v693 = vld [vmem:[%s687 + $0x28] sm:$0xff]
    %v694 = vld [vmem:[%s687 + $0x30] sm:$0xff]
    %v695 = vld [vmem:[%s687 + $0x38] sm:$0xff]
    %v696 = vld [vmem:[%s687 + $0x40] sm:$0xff]
    %v697 = vld [vmem:[%s687 + $0x48] sm:$0xff]
    %v698 = vld [vmem:[%s687 + $0x50] sm:$0xff]
    %v699 = vld [vmem:[%s687 + $0x58] sm:$0xff]
    %v700 = vld [vmem:[%s687 + $0x60] sm:$0xff]
    %v701 = vld [vmem:[%s687 + $0x68] sm:$0xff]
    %v702 = vld [vmem:[%s687 + $0x70] sm:$0xff]
    %v703 = vld [vmem:[%s687 + $0x78] sm:$0xff]
    %v704 = vld [vmem:[%s687 + $0x80] sm:$0xff]
    %v705 = vld [vmem:[%s687 + $0x88] sm:$0xff]
    %v706 = vld [vmem:[%s687 + $0x90] sm:$0xff]
    %v707 = vld [vmem:[%s687 + $0x98] sm:$0xff]
    %v708 = vld [vmem:[%s687 + $0xa0] sm:$0xff]
    %v709 = vld [vmem:[%s687 + $0xa8] sm:$0xff]
    %v710 = vld [vmem:[%s687 + $0xb0] sm:$0xff]
    %v711 = vld [vmem:[%s687 + $0xb8] sm:$0xff]
    %v712 = vld [vmem:[%s687 + $0xc0] sm:$0xff]
    %v713 = vld [vmem:[%s687 + $0xc8] sm:$0xff]
    %v714 = vld [vmem:[%s687 + $0xd0] sm:$0xff]
    %v715 = vld [vmem:[%s687 + $0xd8] sm:$0xff]
    %v716 = vld [vmem:[%s687 + $0xe0] sm:$0xff]
    %v717 = vld [vmem:[%s687 + $0xe8] sm:$0xff]
    %v718 = vld [vmem:[%s687 + $0xf0] sm:$0xff]
    %v719 = vld [vmem:[%s687 + $0xf8] sm:$0xff]
    %v720 = vrot.slane %v196, 4
    %v721 = vrot.slane %v197, 4
    %724 = vmatpush.msra.mxu0 %v703
    %725 = vmatpush.msra.mxu0 %v702
    %726 = vmatpush.msra.mxu0 %v701
    %727 = vmatpush.msra.mxu0 %v700
    %728 = vmatpush.msra.mxu0 %v699
    %729 = vmatpush.msra.mxu0 %v698
    %730 = vmatpush.msra.mxu0 %v697
    %731 = vmatpush.msra.mxu0 %v696
    %732 = vmatpush.msra.mxu0 %v695
    %733 = vmatpush.msra.mxu0 %v694
    %734 = vmatpush.msra.mxu0 %v693
    %735 = vmatpush.msra.mxu0 %v692
    %736 = vmatpush.msra.mxu0 %v691
    %737 = vmatpush.msra.mxu0 %v690
    %738 = vmatpush.msra.mxu0 %v689
    %739 = vmatpush.msra.mxu0 %v688
    %740 = vmatmul.f32.gmra.mxu0 %v720
    %v741 = vpop.f32.mrf.mxu0
    %v742 = vadd.f32 0.0, %v741
    %743 = vdwg.mxu0
    %744 = vmatpush.msra.mxu0 %v719
    %745 = vmatpush.msra.mxu0 %v718
    %746 = vmatpush.msra.mxu0 %v717
    %747 = vmatpush.msra.mxu0 %v716
    %748 = vmatpush.msra.mxu0 %v715
    %749 = vmatpush.msra.mxu0 %v714
    %750 = vmatpush.msra.mxu0 %v713
    %751 = vmatpush.msra.mxu0 %v712
    %752 = vmatpush.msra.mxu0 %v711
    %753 = vmatpush.msra.mxu0 %v710
    %754 = vmatpush.msra.mxu0 %v709
    %755 = vmatpush.msra.mxu0 %v708
    %756 = vmatpush.msra.mxu0 %v707
    %757 = vmatpush.msra.mxu0 %v706
    %758 = vmatpush.msra.mxu0 %v705
    %759 = vmatpush.msra.mxu0 %v704
    %760 = vmatmul.f32.gmra.mxu0 %v721
    %v761 = vpop.f32.mrf.mxu0
    %v762 = vadd.f32 %v742, %v761
    %763 = vdwg.mxu0
    %v764 = vadd.f32 %v641, %v762
    %v765 = vrot.slane %v198, 4
    %v766 = vrot.slane %v199, 4
    %769 = vmatpush.msra.mxu0 %v703
    %770 = vmatpush.msra.mxu0 %v702
    %771 = vmatpush.msra.mxu0 %v701
    %772 = vmatpush.msra.mxu0 %v700
    %773 = vmatpush.msra.mxu0 %v699
    %774 = vmatpush.msra.mxu0 %v698
    %775 = vmatpush.msra.mxu0 %v697
    %776 = vmatpush.msra.mxu0 %v696
    %777 = vmatpush.msra.mxu0 %v695
    %778 = vmatpush.msra.mxu0 %v694
    %779 = vmatpush.msra.mxu0 %v693
    %780 = vmatpush.msra.mxu0 %v692
    %781 = vmatpush.msra.mxu0 %v691
    %782 = vmatpush.msra.mxu0 %v690
    %783 = vmatpush.msra.mxu0 %v689
    %784 = vmatpush.msra.mxu0 %v688
    %785 = vmatmul.f32.gmra.mxu0 %v765
    %v786 = vpop.f32.mrf.mxu0
    %v787 = vadd.f32 0.0, %v786
    %788 = vdwg.mxu0
    %789 = vmatpush.msra.mxu0 %v719
    %790 = vmatpush.msra.mxu0 %v718
    %791 = vmatpush.msra.mxu0 %v717
    %792 = vmatpush.msra.mxu0 %v716
    %793 = vmatpush.msra.mxu0 %v715
    %794 = vmatpush.msra.mxu0 %v714
    %795 = vmatpush.msra.mxu0 %v713
    %796 = vmatpush.msra.mxu0 %v712
    %797 = vmatpush.msra.mxu0 %v711
    %798 = vmatpush.msra.mxu0 %v710
    %799 = vmatpush.msra.mxu0 %v709
    %800 = vmatpush.msra.mxu0 %v708
    %801 = vmatpush.msra.mxu0 %v707
    %802 = vmatpush.msra.mxu0 %v706
    %803 = vmatpush.msra.mxu0 %v705
    %804 = vmatpush.msra.mxu0 %v704
    %805 = vmatmul.f32.gmra.mxu0 %v766
    %v806 = vpop.f32.mrf.mxu0
    %v807 = vadd.f32 %v787, %v806
    %808 = vdwg.mxu0
    %v809 = vadd.f32 %v686, %v807
    %s810 = scalar_lea.vmem %s3, 1280
    %v811 = vld [vmem:[%s810] sm:$0xff]
    %v812 = vld [vmem:[%s810 + $0x8] sm:$0xff]
    %v813 = vld [vmem:[%s810 + $0x10] sm:$0xff]
    %v814 = vld [vmem:[%s810 + $0x18] sm:$0xff]
    %v815 = vld [vmem:[%s810 + $0x20] sm:$0xff]
    %v816 = vld [vmem:[%s810 + $0x28] sm:$0xff]
    %v817 = vld [vmem:[%s810 + $0x30] sm:$0xff]
    %v818 = vld [vmem:[%s810 + $0x38] sm:$0xff]
    %v819 = vld [vmem:[%s810 + $0x40] sm:$0xff]
    %v820 = vld [vmem:[%s810 + $0x48] sm:$0xff]
    %v821 = vld [vmem:[%s810 + $0x50] sm:$0xff]
    %v822 = vld [vmem:[%s810 + $0x58] sm:$0xff]
    %v823 = vld [vmem:[%s810 + $0x60] sm:$0xff]
    %v824 = vld [vmem:[%s810 + $0x68] sm:$0xff]
    %v825 = vld [vmem:[%s810 + $0x70] sm:$0xff]
    %v826 = vld [vmem:[%s810 + $0x78] sm:$0xff]
    %v827 = vld [vmem:[%s810 + $0x80] sm:$0xff]
    %v828 = vld [vmem:[%s810 + $0x88] sm:$0xff]
    %v829 = vld [vmem:[%s810 + $0x90] sm:$0xff]
    %v830 = vld [vmem:[%s810 + $0x98] sm:$0xff]
    %v831 = vld [vmem:[%s810 + $0xa0] sm:$0xff]
    %v832 = vld [vmem:[%s810 + $0xa8] sm:$0xff]
    %v833 = vld [vmem:[%s810 + $0xb0] sm:$0xff]
    %v834 = vld [vmem:[%s810 + $0xb8] sm:$0xff]
    %v835 = vld [vmem:[%s810 + $0xc0] sm:$0xff]
    %v836 = vld [vmem:[%s810 + $0xc8] sm:$0xff]
    %v837 = vld [vmem:[%s810 + $0xd0] sm:$0xff]
    %v838 = vld [vmem:[%s810 + $0xd8] sm:$0xff]
    %v839 = vld [vmem:[%s810 + $0xe0] sm:$0xff]
    %v840 = vld [vmem:[%s810 + $0xe8] sm:$0xff]
    %v841 = vld [vmem:[%s810 + $0xf0] sm:$0xff]
    %v842 = vld [vmem:[%s810 + $0xf8] sm:$0xff]
    %v843 = vrot.slane %v196, 5
    %v844 = vrot.slane %v197, 5
    %847 = vmatpush.msra.mxu0 %v826
    %848 = vmatpush.msra.mxu0 %v825
    %849 = vmatpush.msra.mxu0 %v824
    %850 = vmatpush.msra.mxu0 %v823
    %851 = vmatpush.msra.mxu0 %v822
    %852 = vmatpush.msra.mxu0 %v821
    %853 = vmatpush.msra.mxu0 %v820
    %854 = vmatpush.msra.mxu0 %v819
    %855 = vmatpush.msra.mxu0 %v818
    %856 = vmatpush.msra.mxu0 %v817
    %857 = vmatpush.msra.mxu0 %v816
    %858 = vmatpush.msra.mxu0 %v815
    %859 = vmatpush.msra.mxu0 %v814
    %860 = vmatpush.msra.mxu0 %v813
    %861 = vmatpush.msra.mxu0 %v812
    %862 = vmatpush.msra.mxu0 %v811
    %863 = vmatmul.f32.gmra.mxu0 %v843
    %v864 = vpop.f32.mrf.mxu0
    %v865 = vadd.f32 0.0, %v864
    %866 = vdwg.mxu0
    %867 = vmatpush.msra.mxu0 %v842
    %868 = vmatpush.msra.mxu0 %v841
    %869 = vmatpush.msra.mxu0 %v840
    %870 = vmatpush.msra.mxu0 %v839
    %871 = vmatpush.msra.mxu0 %v838
    %872 = vmatpush.msra.mxu0 %v837
    %873 = vmatpush.msra.mxu0 %v836
    %874 = vmatpush.msra.mxu0 %v835
    %875 = vmatpush.msra.mxu0 %v834
    %876 = vmatpush.msra.mxu0 %v833
    %877 = vmatpush.msra.mxu0 %v832
    %878 = vmatpush.msra.mxu0 %v831
    %879 = vmatpush.msra.mxu0 %v830
    %880 = vmatpush.msra.mxu0 %v829
    %881 = vmatpush.msra.mxu0 %v828
    %882 = vmatpush.msra.mxu0 %v827
    %883 = vmatmul.f32.gmra.mxu0 %v844
    %v884 = vpop.f32.mrf.mxu0
    %v885 = vadd.f32 %v865, %v884
    %886 = vdwg.mxu0
    %v887 = vadd.f32 %v764, %v885
    %v888 = vrot.slane %v198, 5
    %v889 = vrot.slane %v199, 5
    %892 = vmatpush.msra.mxu0 %v826
    %893 = vmatpush.msra.mxu0 %v825
    %894 = vmatpush.msra.mxu0 %v824
    %895 = vmatpush.msra.mxu0 %v823
    %896 = vmatpush.msra.mxu0 %v822
    %897 = vmatpush.msra.mxu0 %v821
    %898 = vmatpush.msra.mxu0 %v820
    %899 = vmatpush.msra.mxu0 %v819
    %900 = vmatpush.msra.mxu0 %v818
    %901 = vmatpush.msra.mxu0 %v817
    %902 = vmatpush.msra.mxu0 %v816
    %903 = vmatpush.msra.mxu0 %v815
    %904 = vmatpush.msra.mxu0 %v814
    %905 = vmatpush.msra.mxu0 %v813
    %906 = vmatpush.msra.mxu0 %v812
    %907 = vmatpush.msra.mxu0 %v811
    %908 = vmatmul.f32.gmra.mxu0 %v888
    %v909 = vpop.f32.mrf.mxu0
    %v910 = vadd.f32 0.0, %v909
    %911 = vdwg.mxu0
    %912 = vmatpush.msra.mxu0 %v842
    %913 = vmatpush.msra.mxu0 %v841
    %914 = vmatpush.msra.mxu0 %v840
    %915 = vmatpush.msra.mxu0 %v839
    %916 = vmatpush.msra.mxu0 %v838
    %917 = vmatpush.msra.mxu0 %v837
    %918 = vmatpush.msra.mxu0 %v836
    %919 = vmatpush.msra.mxu0 %v835
    %920 = vmatpush.msra.mxu0 %v834
    %921 = vmatpush.msra.mxu0 %v833
    %922 = vmatpush.msra.mxu0 %v832
    %923 = vmatpush.msra.mxu0 %v831
    %924 = vmatpush.msra.mxu0 %v830
    %925 = vmatpush.msra.mxu0 %v829
    %926 = vmatpush.msra.mxu0 %v828
    %927 = vmatpush.msra.mxu0 %v827
    %928 = vmatmul.f32.gmra.mxu0 %v889
    %v929 = vpop.f32.mrf.mxu0
    %v930 = vadd.f32 %v910, %v929
    %931 = vdwg.mxu0
    %v932 = vadd.f32 %v809, %v930
    %s933 = scalar_lea.vmem %s3, 1536
    %v934 = vld [vmem:[%s933] sm:$0xff]
    %v935 = vld [vmem:[%s933 + $0x8] sm:$0xff]
    %v936 = vld [vmem:[%s933 + $0x10] sm:$0xff]
    %v937 = vld [vmem:[%s933 + $0x18] sm:$0xff]
    %v938 = vld [vmem:[%s933 + $0x20] sm:$0xff]
    %v939 = vld [vmem:[%s933 + $0x28] sm:$0xff]
    %v940 = vld [vmem:[%s933 + $0x30] sm:$0xff]
    %v941 = vld [vmem:[%s933 + $0x38] sm:$0xff]
    %v942 = vld [vmem:[%s933 + $0x40] sm:$0xff]
    %v943 = vld [vmem:[%s933 + $0x48] sm:$0xff]
    %v944 = vld [vmem:[%s933 + $0x50] sm:$0xff]
    %v945 = vld [vmem:[%s933 + $0x58] sm:$0xff]
    %v946 = vld [vmem:[%s933 + $0x60] sm:$0xff]
    %v947 = vld [vmem:[%s933 + $0x68] sm:$0xff]
    %v948 = vld [vmem:[%s933 + $0x70] sm:$0xff]
    %v949 = vld [vmem:[%s933 + $0x78] sm:$0xff]
    %v950 = vld [vmem:[%s933 + $0x80] sm:$0xff]
    %v951 = vld [vmem:[%s933 + $0x88] sm:$0xff]
    %v952 = vld [vmem:[%s933 + $0x90] sm:$0xff]
    %v953 = vld [vmem:[%s933 + $0x98] sm:$0xff]
    %v954 = vld [vmem:[%s933 + $0xa0] sm:$0xff]
    %v955 = vld [vmem:[%s933 + $0xa8] sm:$0xff]
    %v956 = vld [vmem:[%s933 + $0xb0] sm:$0xff]
    %v957 = vld [vmem:[%s933 + $0xb8] sm:$0xff]
    %v958 = vld [vmem:[%s933 + $0xc0] sm:$0xff]
    %v959 = vld [vmem:[%s933 + $0xc8] sm:$0xff]
    %v960 = vld [vmem:[%s933 + $0xd0] sm:$0xff]
    %v961 = vld [vmem:[%s933 + $0xd8] sm:$0xff]
    %v962 = vld [vmem:[%s933 + $0xe0] sm:$0xff]
    %v963 = vld [vmem:[%s933 + $0xe8] sm:$0xff]
    %v964 = vld [vmem:[%s933 + $0xf0] sm:$0xff]
    %v965 = vld [vmem:[%s933 + $0xf8] sm:$0xff]
    %v966 = vrot.slane %v196, 6
    %v967 = vrot.slane %v197, 6
    %970 = vmatpush.msra.mxu0 %v949
    %971 = vmatpush.msra.mxu0 %v948
    %972 = vmatpush.msra.mxu0 %v947
    %973 = vmatpush.msra.mxu0 %v946
    %974 = vmatpush.msra.mxu0 %v945
    %975 = vmatpush.msra.mxu0 %v944
    %976 = vmatpush.msra.mxu0 %v943
    %977 = vmatpush.msra.mxu0 %v942
    %978 = vmatpush.msra.mxu0 %v941
    %979 = vmatpush.msra.mxu0 %v940
    %980 = vmatpush.msra.mxu0 %v939
    %981 = vmatpush.msra.mxu0 %v938
    %982 = vmatpush.msra.mxu0 %v937
    %983 = vmatpush.msra.mxu0 %v936
    %984 = vmatpush.msra.mxu0 %v935
    %985 = vmatpush.msra.mxu0 %v934
    %986 = vmatmul.f32.gmra.mxu0 %v966
    %v987 = vpop.f32.mrf.mxu0
    %v988 = vadd.f32 0.0, %v987
    %989 = vdwg.mxu0
    %990 = vmatpush.msra.mxu0 %v965
    %991 = vmatpush.msra.mxu0 %v964
    %992 = vmatpush.msra.mxu0 %v963
    %993 = vmatpush.msra.mxu0 %v962
    %994 = vmatpush.msra.mxu0 %v961
    %995 = vmatpush.msra.mxu0 %v960
    %996 = vmatpush.msra.mxu0 %v959
    %997 = vmatpush.msra.mxu0 %v958
    %998 = vmatpush.msra.mxu0 %v957
    %999 = vmatpush.msra.mxu0 %v956
    %1000 = vmatpush.msra.mxu0 %v955
    %1001 = vmatpush.msra.mxu0 %v954
    %1002 = vmatpush.msra.mxu0 %v953
    %1003 = vmatpush.msra.mxu0 %v952
    %1004 = vmatpush.msra.mxu0 %v951
    %1005 = vmatpush.msra.mxu0 %v950
    %1006 = vmatmul.f32.gmra.mxu0 %v967
    %v1007 = vpop.f32.mrf.mxu0
    %v1008 = vadd.f32 %v988, %v1007
    %1009 = vdwg.mxu0
    %v1010 = vadd.f32 %v887, %v1008
    %v1011 = vrot.slane %v198, 6
    %v1012 = vrot.slane %v199, 6
    %1015 = vmatpush.msra.mxu0 %v949
    %1016 = vmatpush.msra.mxu0 %v948
    %1017 = vmatpush.msra.mxu0 %v947
    %1018 = vmatpush.msra.mxu0 %v946
    %1019 = vmatpush.msra.mxu0 %v945
    %1020 = vmatpush.msra.mxu0 %v944
    %1021 = vmatpush.msra.mxu0 %v943
    %1022 = vmatpush.msra.mxu0 %v942
    %1023 = vmatpush.msra.mxu0 %v941
    %1024 = vmatpush.msra.mxu0 %v940
    %1025 = vmatpush.msra.mxu0 %v939
    %1026 = vmatpush.msra.mxu0 %v938
    %1027 = vmatpush.msra.mxu0 %v937
    %1028 = vmatpush.msra.mxu0 %v936
    %1029 = vmatpush.msra.mxu0 %v935
    %1030 = vmatpush.msra.mxu0 %v934
    %1031 = vmatmul.f32.gmra.mxu0 %v1011
    %v1032 = vpop.f32.mrf.mxu0
    %v1033 = vadd.f32 0.0, %v1032
    %1034 = vdwg.mxu0
    %1035 = vmatpush.msra.mxu0 %v965
    %1036 = vmatpush.msra.mxu0 %v964
    %1037 = vmatpush.msra.mxu0 %v963
    %1038 = vmatpush.msra.mxu0 %v962
    %1039 = vmatpush.msra.mxu0 %v961
    %1040 = vmatpush.msra.mxu0 %v960
    %1041 = vmatpush.msra.mxu0 %v959
    %1042 = vmatpush.msra.mxu0 %v958
    %1043 = vmatpush.msra.mxu0 %v957
    %1044 = vmatpush.msra.mxu0 %v956
    %1045 = vmatpush.msra.mxu0 %v955
    %1046 = vmatpush.msra.mxu0 %v954
    %1047 = vmatpush.msra.mxu0 %v953
    %1048 = vmatpush.msra.mxu0 %v952
    %1049 = vmatpush.msra.mxu0 %v951
    %1050 = vmatpush.msra.mxu0 %v950
    %1051 = vmatmul.f32.gmra.mxu0 %v1012
    %v1052 = vpop.f32.mrf.mxu0
    %v1053 = vadd.f32 %v1033, %v1052
    %1054 = vdwg.mxu0
    %v1055 = vadd.f32 %v932, %v1053
    %s1056 = scalar_lea.vmem %s3, 1792
    %v1057 = vld [vmem:[%s1056] sm:$0xff]
    %v1058 = vld [vmem:[%s1056 + $0x8] sm:$0xff]
    %v1059 = vld [vmem:[%s1056 + $0x10] sm:$0xff]
    %v1060 = vld [vmem:[%s1056 + $0x18] sm:$0xff]
    %v1061 = vld [vmem:[%s1056 + $0x20] sm:$0xff]
    %v1062 = vld [vmem:[%s1056 + $0x28] sm:$0xff]
    %v1063 = vld [vmem:[%s1056 + $0x30] sm:$0xff]
    %v1064 = vld [vmem:[%s1056 + $0x38] sm:$0xff]
    %v1065 = vld [vmem:[%s1056 + $0x40] sm:$0xff]
    %v1066 = vld [vmem:[%s1056 + $0x48] sm:$0xff]
    %v1067 = vld [vmem:[%s1056 + $0x50] sm:$0xff]
    %v1068 = vld [vmem:[%s1056 + $0x58] sm:$0xff]
    %v1069 = vld [vmem:[%s1056 + $0x60] sm:$0xff]
    %v1070 = vld [vmem:[%s1056 + $0x68] sm:$0xff]
    %v1071 = vld [vmem:[%s1056 + $0x70] sm:$0xff]
    %v1072 = vld [vmem:[%s1056 + $0x78] sm:$0xff]
    %v1073 = vld [vmem:[%s1056 + $0x80] sm:$0xff]
    %v1074 = vld [vmem:[%s1056 + $0x88] sm:$0xff]
    %v1075 = vld [vmem:[%s1056 + $0x90] sm:$0xff]
    %v1076 = vld [vmem:[%s1056 + $0x98] sm:$0xff]
    %v1077 = vld [vmem:[%s1056 + $0xa0] sm:$0xff]
    %v1078 = vld [vmem:[%s1056 + $0xa8] sm:$0xff]
    %v1079 = vld [vmem:[%s1056 + $0xb0] sm:$0xff]
    %v1080 = vld [vmem:[%s1056 + $0xb8] sm:$0xff]
    %v1081 = vld [vmem:[%s1056 + $0xc0] sm:$0xff]
    %v1082 = vld [vmem:[%s1056 + $0xc8] sm:$0xff]
    %v1083 = vld [vmem:[%s1056 + $0xd0] sm:$0xff]
    %v1084 = vld [vmem:[%s1056 + $0xd8] sm:$0xff]
    %v1085 = vld [vmem:[%s1056 + $0xe0] sm:$0xff]
    %v1086 = vld [vmem:[%s1056 + $0xe8] sm:$0xff]
    %v1087 = vld [vmem:[%s1056 + $0xf0] sm:$0xff]
    %v1088 = vld [vmem:[%s1056 + $0xf8] sm:$0xff]
    %v1089 = vrot.slane %v196, 7
    %v1090 = vrot.slane %v197, 7
    %1093 = vmatpush.msra.mxu0 %v1072
    %1094 = vmatpush.msra.mxu0 %v1071
    %1095 = vmatpush.msra.mxu0 %v1070
    %1096 = vmatpush.msra.mxu0 %v1069
    %1097 = vmatpush.msra.mxu0 %v1068
    %1098 = vmatpush.msra.mxu0 %v1067
    %1099 = vmatpush.msra.mxu0 %v1066
    %1100 = vmatpush.msra.mxu0 %v1065
    %1101 = vmatpush.msra.mxu0 %v1064
    %1102 = vmatpush.msra.mxu0 %v1063
    %1103 = vmatpush.msra.mxu0 %v1062
    %1104 = vmatpush.msra.mxu0 %v1061
    %1105 = vmatpush.msra.mxu0 %v1060
    %1106 = vmatpush.msra.mxu0 %v1059
    %1107 = vmatpush.msra.mxu0 %v1058
    %1108 = vmatpush.msra.mxu0 %v1057
    %1109 = vmatmul.f32.gmra.mxu0 %v1089
    %v1110 = vpop.f32.mrf.mxu0
    %v1111 = vadd.f32 0.0, %v1110
    %1112 = vdwg.mxu0
    %1113 = vmatpush.msra.mxu0 %v1088
    %1114 = vmatpush.msra.mxu0 %v1087
    %1115 = vmatpush.msra.mxu0 %v1086
    %1116 = vmatpush.msra.mxu0 %v1085
    %1117 = vmatpush.msra.mxu0 %v1084
    %1118 = vmatpush.msra.mxu0 %v1083
    %1119 = vmatpush.msra.mxu0 %v1082
    %1120 = vmatpush.msra.mxu0 %v1081
    %1121 = vmatpush.msra.mxu0 %v1080
    %1122 = vmatpush.msra.mxu0 %v1079
    %1123 = vmatpush.msra.mxu0 %v1078
    %1124 = vmatpush.msra.mxu0 %v1077
    %1125 = vmatpush.msra.mxu0 %v1076
    %1126 = vmatpush.msra.mxu0 %v1075
    %1127 = vmatpush.msra.mxu0 %v1074
    %1128 = vmatpush.msra.mxu0 %v1073
    %1129 = vmatmul.f32.gmra.mxu0 %v1090
    %v1130 = vpop.f32.mrf.mxu0
    %v1131 = vadd.f32 %v1111, %v1130
    %1132 = vdwg.mxu0
    %v1133 = vadd.f32 %v1010, %v1131
    %v1134 = vrot.slane %v198, 7
    %v1135 = vrot.slane %v199, 7
    %1138 = vmatpush.msra.mxu0 %v1072
    %1139 = vmatpush.msra.mxu0 %v1071
    %1140 = vmatpush.msra.mxu0 %v1070
    %1141 = vmatpush.msra.mxu0 %v1069
    %1142 = vmatpush.msra.mxu0 %v1068
    %1143 = vmatpush.msra.mxu0 %v1067
    %1144 = vmatpush.msra.mxu0 %v1066
    %1145 = vmatpush.msra.mxu0 %v1065
    %1146 = vmatpush.msra.mxu0 %v1064
    %1147 = vmatpush.msra.mxu0 %v1063
    %1148 = vmatpush.msra.mxu0 %v1062
    %1149 = vmatpush.msra.mxu0 %v1061
    %1150 = vmatpush.msra.mxu0 %v1060
    %1151 = vmatpush.msra.mxu0 %v1059
    %1152 = vmatpush.msra.mxu0 %v1058
    %1153 = vmatpush.msra.mxu0 %v1057
    %1154 = vmatmul.f32.gmra.mxu0 %v1134
    %v1155 = vpop.f32.mrf.mxu0
    %v1156 = vadd.f32 0.0, %v1155
    %1157 = vdwg.mxu0
    %1158 = vmatpush.msra.mxu0 %v1088
    %1159 = vmatpush.msra.mxu0 %v1087
    %1160 = vmatpush.msra.mxu0 %v1086
    %1161 = vmatpush.msra.mxu0 %v1085
    %1162 = vmatpush.msra.mxu0 %v1084
    %1163 = vmatpush.msra.mxu0 %v1083
    %1164 = vmatpush.msra.mxu0 %v1082
    %1165 = vmatpush.msra.mxu0 %v1081
    %1166 = vmatpush.msra.mxu0 %v1080
    %1167 = vmatpush.msra.mxu0 %v1079
    %1168 = vmatpush.msra.mxu0 %v1078
    %1169 = vmatpush.msra.mxu0 %v1077
    %1170 = vmatpush.msra.mxu0 %v1076
    %1171 = vmatpush.msra.mxu0 %v1075
    %1172 = vmatpush.msra.mxu0 %v1074
    %1173 = vmatpush.msra.mxu0 %v1073
    %1174 = vmatmul.f32.gmra.mxu0 %v1135
    %v1175 = vpop.f32.mrf.mxu0
    %v1176 = vadd.f32 %v1156, %v1175
    %1177 = vdwg.mxu0
    %v1178 = vadd.f32 %v1055, %v1176
    %v1180 = vperm.slane %v1178, 0
    %vm1182 = vcmask 1040384
    %v1183 = vsel %vm1182, %v1133, %v1180
    %v1184 = vmax.f32 %v1183, 0.0
    %v1186 = vperm.slane %v46, 0
    %1188 = vmatpush.msra.mxu0 %v45
    %1189 = vmatpush.msra.mxu0 %v44
    %1190 = vmatpush.msra.mxu0 %v43
    %1191 = vmatpush.msra.mxu0 %v42
    %1192 = vmatpush.msra.mxu0 %v41
    %1193 = vmatpush.msra.mxu0 %v40
    %1194 = vmatpush.msra.mxu0 %v39
    %1195 = vmatpush.msra.mxu0 %v38
    %1196 = vmatpush.msra.mxu0 %v37
    %1197 = vmatpush.msra.mxu0 %v36
    %1198 = vmatpush.msra.mxu0 %v35
    %1199 = vmatpush.msra.mxu0 %v34
    %1200 = vmatpush.msra.mxu0 %v33
    %1201 = vmatpush.msra.mxu0 %v32
    %1202 = vmatpush.msra.mxu0 %v31
    %1203 = vmatpush.msra.mxu0 %v30
    %1204 = vmatmul.f32.gmra.mxu0 %v1184
    %v1205 = vpop.f32.mrf.mxu0
    %v1206 = vadd.f32 %v1186, %v1205
    %1207 = vdwg.mxu0
    %1208 = vst [vmem:[#allocation2] sm:$0x3] %v1206
    // Predicated region
    $region30: #{_forward_impl.1} parent=1 // pred_check
      _
    $region31: #{_forward_impl.1} parent=1 // pred_check_branch
      %1210 = sbr.rel (0) target = $region33
    $region32: #{_forward_impl.1} parent=1 // pred_region
      %1212 = vsyncadd [#allocation3], 0
      %s1214 = sshll.u32 [#allocation2], 4
      %s1215 = int_to_ptr.vmem [resolvable:$true] %s1214
      %s1216 = sshll.u32 %s7, 4
      %s1217 = int_to_ptr.hbm [resolvable:$true] %s1216
      %1219 = dma.vmem_to_hbm [thread:$0]  %s1215, 32, %s1217, [#allocation3]
    $region33: #{_forward_impl.1} parent=1 // pred_fallthru
      _
    // Predicated region
    $region34: #{_forward_impl.1} parent=1 // pred_check
      _
    $region35: #{_forward_impl.1} parent=1 // pred_check_branch
      %1221 = sbr.rel (0) target = $region37
    $region36: #{_forward_impl.1} parent=1 // pred_region
      %1223 = dma.done [#allocation3], 32
    $region37: #{_forward_impl.1} parent=1 // pred_fallthru
      _
    %1224 = vsyncpa [#allocation3], 1

</llo_original>
